<compile_context>
chip_gen: v7x
topology: tpu7x:2x2x1
jax: 0.10.0
libtpu: 0.0.40
codegen_flags: <defaults>
</compile_context>

<pallas_src>
import functools

import jax
import jax.numpy as jnp
from jax import lax
from jax.experimental import pallas as pl
from jax.experimental.pallas import tpu as pltpu


def _round_up(n: int, m: int) -> int:
    return ((n + m - 1) // m) * m


def _mlp_kernel(x_ref, w1_ref, b1_ref, w2_ref, b2_ref, w3_ref, b3_ref, o_ref,
                *, chunk):
    # x_ref: (26, tb)   w1: (100, 26)  b1: (100, 1)
    # o_ref: (4,  tb)   w2: (50, 100)  b2: (50, 1)
    #                   w3: (4,  50)   b3: (4,  1)
    tb = x_ref.shape[1]
    n_chunks = tb // chunk

    # Weights are VMEM-resident across grid steps (constant index_map).
    w1 = w1_ref[...]
    w2 = w2_ref[...]
    w3 = w3_ref[...]

    # Hoist the bias lane-broadcasts out of the chunk loop (JAX does not CSE
    # broadcast_in_dim inside loops).  Epilogue stays f32 (v5e-safe).
    b1 = jnp.broadcast_to(b1_ref[...], (w1_ref.shape[0], chunk))
    b2 = jnp.broadcast_to(b2_ref[...], (w2_ref.shape[0], chunk))
    b3 = jnp.broadcast_to(b3_ref[...], (w3_ref.shape[0], chunk))

    # bf16 operands: single MXU pass with f32 accumulation (all gens).
    # f32 operands: force full precision so tolerances hold on every chip.
    prec = lax.Precision.HIGHEST if w1.dtype == jnp.float32 else None

    def body(c, carry):
        off = pl.multiple_of(c * chunk, chunk)
        xs = x_ref[:, pl.ds(off, chunk)]                         # (26, chunk)

        # Layer 1: (100, 26) @ (26, chunk) -> relu
        h1 = jnp.dot(w1, xs, preferred_element_type=jnp.float32,
                     precision=prec)
        h1 = jnp.maximum(h1 + b1, 0.0)

        # Layer 2: (50, 100) @ (100, chunk) -> relu
        h2 = jnp.dot(w2, h1.astype(w2.dtype),
                     preferred_element_type=jnp.float32, precision=prec)
        h2 = jnp.maximum(h2 + b2, 0.0)

        # Layer 3: (4, 50) @ (50, chunk)   (no activation)
        y = jnp.dot(w3, h2.astype(w3.dtype),
                    preferred_element_type=jnp.float32, precision=prec)
        o_ref[:, pl.ds(off, chunk)] = (y + b3).astype(o_ref.dtype)
        return carry

    lax.fori_loop(0, n_chunks, body, 0, unroll=True)


def net_forward(x, params, *, tile_b: int = 2048, chunk_b: int = 256,
                matmul_dtype=jnp.bfloat16):
    """Forward pass of `Net`.

    x: (B, 26) float32.
    params: PyTorch-native layout: w1 (100,26) b1 (100,) w2 (50,100) b2 (50,)
            w3 (4,50) b3 (4,).
    tile_b: batch tile (lanes per grid step), rounded to a multiple of chunk_b.
    chunk_b: in-kernel lane chunk (bounds h1/h2 live ranges), multiple of 128.
    matmul_dtype: MXU operand dtype (default bf16 on all gens); accumulation,
        bias and ReLU remain f32.  Pass None for an f32/HIGHEST path.

    Note: for genuinely tiny batches (a single game state) plain fused XLA
    would beat a standalone pallas_call; the kernel pays off at larger batch
    or when fused into a bigger pipeline.
    """
    w1, b1 = params["w1"], params["b1"]
    w2, b2 = params["w2"], params["b2"]
    w3, b3 = params["w3"], params["b3"]
    B = x.shape[0]
    d_in, d_out = w1.shape[1], w3.shape[0]

    # Lane granularity: multiples of 128; 256 default fills v6e/v7x's MXU.
    chunk = max(128, _round_up(chunk_b, 128))
    target = max(chunk, _round_up(tile_b, chunk))
    # v7x megacore: any batch spanning >1 tile yields >= 2 parallel grid steps.
    half = max(chunk, _round_up(pl.cdiv(B, 2), chunk))
    tb = min(target, half)
    b_pad = _round_up(B, tb)

    # Feature-major layout: batch on the lane axis.
    xt = x.T                                                   # (26, B)
    if matmul_dtype is not None:
        xt = xt.astype(matmul_dtype)
        w1 = w1.astype(matmul_dtype)
        w2 = w2.astype(matmul_dtype)
        w3 = w3.astype(matmul_dtype)
    if b_pad != B:
        # Pad ragged batches so every tile is in-bounds (no VMEM OOB checks);
        # padded columns are computed and sliced off below.
        xt = jnp.pad(xt, ((0, 0), (0, b_pad - B)))

    # Biases as f32 (out, 1) columns (f32 epilogue on all gens).
    b1c = b1.reshape(-1, 1).astype(jnp.float32)
    b2c = b2.reshape(-1, 1).astype(jnp.float32)
    b3c = b3.reshape(-1, 1).astype(jnp.float32)

    grid = (b_pad // tb,)

    # Weights/biases: constant block index -> fetched once, VMEM-resident.
    def resident(a):
        return pl.BlockSpec(a.shape, lambda i: (0,) * a.ndim)

    flops = 2 * b_pad * (26 * 100 + 100 * 50 + 50 * 4)
    bytes_accessed = int(
        xt.size * xt.dtype.itemsize
        + sum(a.size * a.dtype.itemsize for a in (w1, b1c, w2, b2c, w3, b3c))
        + b_pad * d_out * 4)

    out_t = pl.pallas_call(
        functools.partial(_mlp_kernel, chunk=chunk),
        out_shape=jax.ShapeDtypeStruct((d_out, b_pad), jnp.float32),
        grid=grid,
        in_specs=[
            pl.BlockSpec((d_in, tb), lambda i: (0, i)),   # x^T: lane-tiled batch
            resident(w1), resident(b1c),
            resident(w2), resident(b2c),
            resident(w3), resident(b3c),
        ],
        out_specs=pl.BlockSpec((d_out, tb), lambda i: (0, i)),  # lane-dense y^T
        compiler_params=pltpu.CompilerParams(
            dimension_semantics=("parallel",)),           # v7x megacore sharding
        cost_estimate=pl.CostEstimate(
            flops=flops, transcendentals=0, bytes_accessed=bytes_accessed),
    )(xt, w1, b1c, w2, b2c, w3, b3c)

    return out_t[:, :B].T                                 # back to (B, 4)


def init_params(key):
    """PyTorch-style nn.Linear init (uniform +/- 1/sqrt(fan_in)), native
    (out, in) weight layout and (out,) biases."""
    dims = [(26, 100), (100, 50), (50, 4)]
    params = {}
    for i, (fan_in, fan_out) in enumerate(dims, start=1):
        key, kw, kb = jax.random.split(key, 3)
        bound = 1.0 / jnp.sqrt(float(fan_in))
        params[f"w{i}"] = jax.random.uniform(
            kw, (fan_out, fan_in), jnp.float32, -bound, bound)
        params[f"b{i}"] = jax.random.uniform(
            kb, (fan_out,), jnp.float32, -bound, bound)
    return params


def reference_forward(x, params):
    dot = functools.partial(jnp.dot, precision=lax.Precision.HIGHEST)
    h1 = jnp.maximum(dot(x, params["w1"].T) + params["b1"], 0.0)
    h2 = jnp.maximum(dot(h1, params["w2"].T) + params["b2"], 0.0)
    return dot(h2, params["w3"].T) + params["b3"]


if __name__ == "__main__":
    key = jax.random.PRNGKey(0)
    kx, kp = jax.random.split(key)
    params = init_params(kp)

    # 1) Tiny single-tile batch, f32 MXU path (HIGHEST precision) -> tight tol.
    B = 8
    x = jax.random.normal(kx, (B, 26), dtype=jnp.float32)
    out = jax.block_until_ready(net_forward(x, params, matmul_dtype=None))
    ref = reference_forward(x, params)
    assert out.shape == (B, 4), out.shape
    assert jnp.allclose(out, ref, atol=1e-5, rtol=1e-5), "f32 mismatch (B=8)"

    # 2) Ragged batch, 2 grid steps with 128-lane chunks, default bf16 operands.
    B2 = 200
    x2 = jax.random.normal(jax.random.PRNGKey(1), (B2, 26), dtype=jnp.float32)
    out2 = jax.block_until_ready(net_forward(x2, params, chunk_b=128))
    ref2 = reference_forward(x2, params)
    assert out2.shape == (B2, 4), out2.shape
    assert jnp.allclose(out2, ref2, atol=5e-2, rtol=5e-2), "bf16 mismatch (ragged)"

    # 3) Multi-chunk, multi-grid-step batch (>= 2 parallel steps for v7x).
    B3 = 600
    x3 = jax.random.normal(jax.random.PRNGKey(2), (B3, 26), dtype=jnp.float32)
    out3 = jax.block_until_ready(net_forward(x3, params))
    ref3 = reference_forward(x3, params)
    assert out3.shape == (B3, 4), out3.shape
    assert jnp.allclose(out3, ref3, atol=5e-2, rtol=5e-2), "bf16 mismatch (multi-step)"

    print("KERNEL_OK")
</pallas_src>

<mosaic_0001>
module attributes {stable_mosaic.version = 11 : i64} {
  func.func @_mlp_kernel(%arg0: i32, %arg1: memref<26x256xf32, #tpu.memory_space<vmem>>, %arg2: memref<100x26xf32, #tpu.memory_space<vmem>>, %arg3: memref<100x1xf32, #tpu.memory_space<vmem>>, %arg4: memref<50x100xf32, #tpu.memory_space<vmem>>, %arg5: memref<50x1xf32, #tpu.memory_space<vmem>>, %arg6: memref<4x50xf32, #tpu.memory_space<vmem>>, %arg7: memref<4x1xf32, #tpu.memory_space<vmem>>, %arg8: memref<4x256xf32, #tpu.memory_space<vmem>>) attributes {dimension_semantics = [#tpu.dimension_semantics<parallel>], iteration_bounds = array<i64: 1>, scalar_prefetch = 0 : i64, scratch_operands = 0 : i64, tpu.core_type = #tpu.core_type<tc>, window_params = [{transform_indices = @transform_0, window_bounds = array<i64: 26, 256>}, {pipeline_mode = #tpu.pipeline_mode<synchronous>, transform_indices = @transform_1, window_bounds = array<i64: 100, 26>}, {pipeline_mode = #tpu.pipeline_mode<synchronous>, transform_indices = @transform_2, window_bounds = array<i64: 100, 1>}, {pipeline_mode = #tpu.pipeline_mode<synchronous>, transform_indices = @transform_3, window_bounds = array<i64: 50, 100>}, {pipeline_mode = #tpu.pipeline_mode<synchronous>, transform_indices = @transform_4, window_bounds = array<i64: 50, 1>}, {pipeline_mode = #tpu.pipeline_mode<synchronous>, transform_indices = @transform_5, window_bounds = array<i64: 4, 50>}, {pipeline_mode = #tpu.pipeline_mode<synchronous>, transform_indices = @transform_6, window_bounds = array<i64: 4, 1>}, {transform_indices = @transform_7, window_bounds = array<i64: 4, 256>}]} {
    %c0 = arith.constant 0 : index
    %c0_0 = arith.constant 0 : index
    %0 = vector.load %arg2[%c0, %c0_0] : memref<100x26xf32, #tpu.memory_space<vmem>>, vector<100x26xf32>
    %c0_1 = arith.constant 0 : index
    %c0_2 = arith.constant 0 : index
    %1 = vector.load %arg4[%c0_1, %c0_2] : memref<50x100xf32, #tpu.memory_space<vmem>>, vector<50x100xf32>
    %c0_3 = arith.constant 0 : index
    %c0_4 = arith.constant 0 : index
    %2 = vector.load %arg6[%c0_3, %c0_4] : memref<4x50xf32, #tpu.memory_space<vmem>>, vector<4x50xf32>
    %c0_5 = arith.constant 0 : index
    %c0_6 = arith.constant 0 : index
    %3 = vector.load %arg3[%c0_5, %c0_6] : memref<100x1xf32, #tpu.memory_space<vmem>>, vector<100x1xf32>
    %4 = vector.shape_cast %3 : vector<100x1xf32> to vector<100x1xf32>
    %5 = vector.broadcast %4 : vector<100x1xf32> to vector<100x256xf32>
    %c0_7 = arith.constant 0 : index
    %c0_8 = arith.constant 0 : index
    %6 = vector.load %arg5[%c0_7, %c0_8] : memref<50x1xf32, #tpu.memory_space<vmem>>, vector<50x1xf32>
    %7 = vector.shape_cast %6 : vector<50x1xf32> to vector<50x1xf32>
    %8 = vector.broadcast %7 : vector<50x1xf32> to vector<50x256xf32>
    %c0_9 = arith.constant 0 : index
    %c0_10 = arith.constant 0 : index
    %9 = vector.load %arg7[%c0_9, %c0_10] : memref<4x1xf32, #tpu.memory_space<vmem>>, vector<4x1xf32>
    %10 = vector.shape_cast %9 : vector<4x1xf32> to vector<4x1xf32>
    %11 = vector.broadcast %10 : vector<4x1xf32> to vector<4x256xf32>
    %c0_i32 = arith.constant 0 : i32
    %c256_i32 = arith.constant 256 : i32
    %12 = arith.muli %c0_i32, %c256_i32 : i32
    %13 = tpu.assume_multiple %12, 256 : i32
    %c0_11 = arith.constant 0 : index
    %14 = arith.index_cast %13 : i32 to index
    %15 = vector.load %arg1[%c0_11, %14] : memref<26x256xf32, #tpu.memory_space<vmem>>, vector<26x256xf32>
    %cst = arith.constant dense<0.000000e+00> : vector<100x256xf32>
    %16 = tpu.matmul %0, %15, %cst {dimension_numbers = #tpu.dot_dimension_numbers<[1], [0], [0], [1], [0, 0, 1, 1], [], []>, precision = #tpu.contract_precision<fp32>} : vector<100x26xf32>, vector<26x256xf32>, vector<100x256xf32> -> vector<100x256xf32>
    %17 = arith.addf %16, %5 : vector<100x256xf32>
    %cst_12 = arith.constant 0.000000e+00 : f32
    %18 = vector.broadcast %cst_12 : f32 to vector<100x256xf32>
    %19 = arith.maximumf %17, %18 : vector<100x256xf32>
    %cst_13 = arith.constant dense<0.000000e+00> : vector<50x256xf32>
    %20 = tpu.matmul %1, %19, %cst_13 {dimension_numbers = #tpu.dot_dimension_numbers<[1], [0], [0], [1], [0, 0, 1, 1], [], []>, precision = #tpu.contract_precision<fp32>} : vector<50x100xf32>, vector<100x256xf32>, vector<50x256xf32> -> vector<50x256xf32>
    %21 = arith.addf %20, %8 : vector<50x256xf32>
    %cst_14 = arith.constant 0.000000e+00 : f32
    %22 = vector.broadcast %cst_14 : f32 to vector<50x256xf32>
    %23 = arith.maximumf %21, %22 : vector<50x256xf32>
    %cst_15 = arith.constant dense<0.000000e+00> : vector<4x256xf32>
    %24 = tpu.matmul %2, %23, %cst_15 {dimension_numbers = #tpu.dot_dimension_numbers<[1], [0], [0], [1], [0, 0, 1, 1], [], []>, precision = #tpu.contract_precision<fp32>} : vector<4x50xf32>, vector<50x256xf32>, vector<4x256xf32> -> vector<4x256xf32>
    %25 = arith.addf %24, %11 : vector<4x256xf32>
    %c0_16 = arith.constant 0 : index
    %26 = arith.index_cast %13 : i32 to index
    %27 = vector.load %arg8[%c0_16, %26] : memref<4x256xf32, #tpu.memory_space<vmem>>, vector<4x256xf32>
    tpu.vector_store %arg8[%c0_16, %26], %25 {strides = array<i32>} : memref<4x256xf32, #tpu.memory_space<vmem>>, vector<4x256xf32>,
    %c1_i32 = arith.constant 1 : i32
    return
  }
  func.func @transform_0(%arg0: i32) -> (i32, i32) {
    %c0_i32 = arith.constant 0 : i32
    %c0_i32_0 = arith.constant 0 : i32
    return %c0_i32, %arg0 : i32, i32
  }
  func.func @transform_1(%arg0: i32) -> (i32, i32) {
    %c0_i32 = arith.constant 0 : i32
    %c0_i32_0 = arith.constant 0 : i32
    %c0_i32_1 = arith.constant 0 : i32
    return %c0_i32, %c0_i32_0 : i32, i32
  }
  func.func @transform_2(%arg0: i32) -> (i32, i32) {
    %c0_i32 = arith.constant 0 : i32
    %c0_i32_0 = arith.constant 0 : i32
    %c0_i32_1 = arith.constant 0 : i32
    return %c0_i32, %c0_i32_0 : i32, i32
  }
  func.func @transform_3(%arg0: i32) -> (i32, i32) {
    %c0_i32 = arith.constant 0 : i32
    %c0_i32_0 = arith.constant 0 : i32
    %c0_i32_1 = arith.constant 0 : i32
    return %c0_i32, %c0_i32_0 : i32, i32
  }
  func.func @transform_4(%arg0: i32) -> (i32, i32) {
    %c0_i32 = arith.constant 0 : i32
    %c0_i32_0 = arith.constant 0 : i32
    %c0_i32_1 = arith.constant 0 : i32
    return %c0_i32, %c0_i32_0 : i32, i32
  }
  func.func @transform_5(%arg0: i32) -> (i32, i32) {
    %c0_i32 = arith.constant 0 : i32
    %c0_i32_0 = arith.constant 0 : i32
    %c0_i32_1 = arith.constant 0 : i32
    return %c0_i32, %c0_i32_0 : i32, i32
  }
  func.func @transform_6(%arg0: i32) -> (i32, i32) {
    %c0_i32 = arith.constant 0 : i32
    %c0_i32_0 = arith.constant 0 : i32
    %c0_i32_1 = arith.constant 0 : i32
    return %c0_i32, %c0_i32_0 : i32, i32
  }
  func.func @transform_7(%arg0: i32) -> (i32, i32) {
    %c0_i32 = arith.constant 0 : i32
    %c0_i32_0 = arith.constant 0 : i32
    return %c0_i32, %arg0 : i32, i32
  }
}

</mosaic_0001>

<llo_original>
// kernel: tpu_custom_call.1
$region0: #{tpu_custom_call.1}
  #allocation0 [shape = 'u32[]', space=smem, size = 0x4, offset = 0x4, fixed_abs, tag = 'smem constant byte address 0x4 - core index']
  #allocation1 [shape = 'u32[144,128]{1,0:T(1,128)}', space=vmem, size = 0x12000, scoped, tag = 'internal scratch']
  %s0 = inlined_call_operand.vmem [shape: f32[26,256], index: 0, kind: input, shape index: {}]
  %s1 = inlined_call_operand.vmem [shape: f32[100,26], index: 1, kind: input, shape index: {}]
  %s2 = inlined_call_operand.vmem [shape: f32[100,1], index: 2, kind: input, shape index: {}]
  %s3 = inlined_call_operand.vmem [shape: f32[50,100], index: 3, kind: input, shape index: {}]
  %s4 = inlined_call_operand.vmem [shape: f32[50,1], index: 4, kind: input, shape index: {}]
  %s5 = inlined_call_operand.vmem [shape: f32[4,50], index: 5, kind: input, shape index: {}]
  %s6 = inlined_call_operand.vmem [shape: f32[4,1], index: 6, kind: input, shape index: {}]
  %s7 = inlined_call_operand.hbm [shape: f32[4,256], index: 7, kind: output, shape index: {}]
  %s8 = sld [smem:[#allocation0]]
  $region38: #{tpu_custom_call.1} parent=0
    _
  %s10 = ssub.s32 1, %s8
  %s11 = scalar_select 0, %s10, %s8
  $region1: #{tpu_custom_call.1} parent=0
    #allocation2 [shape = 'u8[4096]{0}', space=vmem, size = 0x1000, scoped, tag = 'output window, operand 0, single buffered']
    #allocation3 [shape = 's32[1]{0}', space=sflag, size = 0x4, scoped, tag = 'scoped memory for tpu_custom_call.1']
    %12 = vsyncpa [#allocation3], 0
    // Predicated region
    $region2: #{tpu_custom_call.1} parent=1 // pred_check
      _
    $region3: #{tpu_custom_call.1} parent=1 // pred_check_branch
      %14 = sbr.rel (0) target = $region5
    $region4: #{tpu_custom_call.1} parent=1 // pred_region
      _
    $region5: #{tpu_custom_call.1} parent=1 // pred_fallthru
      _
    // Predicated region
    $region6: #{tpu_custom_call.1} parent=1 // pred_check
      _
    $region7: #{tpu_custom_call.1} parent=1 // pred_check_branch
      %16 = sbr.rel (0) target = $region9
    $region8: #{tpu_custom_call.1} parent=1 // pred_region
      _
    $region9: #{tpu_custom_call.1} parent=1 // pred_fallthru
      _
    // Predicated region
    $region10: #{tpu_custom_call.1} parent=1 // pred_check
      _
    $region11: #{tpu_custom_call.1} parent=1 // pred_check_branch
      %18 = sbr.rel (0) target = $region13
    $region12: #{tpu_custom_call.1} parent=1 // pred_region
      _
    $region13: #{tpu_custom_call.1} parent=1 // pred_fallthru
      _
    // Predicated region
    $region14: #{tpu_custom_call.1} parent=1 // pred_check
      _
    $region15: #{tpu_custom_call.1} parent=1 // pred_check_branch
      %20 = sbr.rel (0) target = $region17
    $region16: #{tpu_custom_call.1} parent=1 // pred_region
      _
    $region17: #{tpu_custom_call.1} parent=1 // pred_fallthru
      _
    // Predicated region
    $region18: #{tpu_custom_call.1} parent=1 // pred_check
      _
    $region19: #{tpu_custom_call.1} parent=1 // pred_check_branch
      %22 = sbr.rel (0) target = $region21
    $region20: #{tpu_custom_call.1} parent=1 // pred_region
      _
    $region21: #{tpu_custom_call.1} parent=1 // pred_fallthru
      _
    // Predicated region
    $region22: #{tpu_custom_call.1} parent=1 // pred_check
      _
    $region23: #{tpu_custom_call.1} parent=1 // pred_check_branch
      %24 = sbr.rel (0) target = $region25
    $region24: #{tpu_custom_call.1} parent=1 // pred_region
      _
    $region25: #{tpu_custom_call.1} parent=1 // pred_fallthru
      _
    // Predicated region
    $region26: #{tpu_custom_call.1} parent=1 // pred_check
      _
    $region27: #{tpu_custom_call.1} parent=1 // pred_check_branch
      %26 = sbr.rel (0) target = $region29
    $region28: #{tpu_custom_call.1} parent=1 // pred_region
      _
    $region29: #{tpu_custom_call.1} parent=1 // pred_fallthru
      _
    %v27 = vld [vmem:[%s1] sm:$0xff]
    %v28 = vld [vmem:[%s1 + $0x8] sm:$0xff]
    %v29 = vld [vmem:[%s1 + $0x10] sm:$0xff]
    %v30 = vld [vmem:[%s1 + $0x18] sm:$0xff]
    %v31 = vld [vmem:[%s1 + $0x20] sm:$0xff]
    %v32 = vld [vmem:[%s1 + $0x28] sm:$0xff]
    %v33 = vld [vmem:[%s1 + $0x30] sm:$0xff]
    %v34 = vld [vmem:[%s1 + $0x38] sm:$0xff]
    %v35 = vld [vmem:[%s1 + $0x40] sm:$0xff]
    %v36 = vld [vmem:[%s1 + $0x48] sm:$0xff]
    %v37 = vld [vmem:[%s1 + $0x50] sm:$0xff]
    %v38 = vld [vmem:[%s1 + $0x58] sm:$0xff]
    %v39 = vld [vmem:[%s1 + $0x60] sm:$0xf]
    %v40 = vld [vmem:[%s3] sm:$0xff]
    %v41 = vld [vmem:[%s3 + $0x8] sm:$0xff]
    %v42 = vld [vmem:[%s3 + $0x10] sm:$0xff]
    %v43 = vld [vmem:[%s3 + $0x18] sm:$0xff]
    %v44 = vld [vmem:[%s3 + $0x20] sm:$0xff]
    %v45 = vld [vmem:[%s3 + $0x28] sm:$0xff]
    %v46 = vld [vmem:[%s3 + $0x30] sm:$0x3]
    %v47 = vld [vmem:[%s5] sm:$0xf]
    %v48 = vld [vmem:[%s2] sm:$0xff]
    %v49 = vld [vmem:[%s2 + $0x8] sm:$0xff]
    %v50 = vld [vmem:[%s2 + $0x10] sm:$0xff]
    %v51 = vld [vmem:[%s2 + $0x18] sm:$0xff]
    %v52 = vld [vmem:[%s2 + $0x20] sm:$0xff]
    %v53 = vld [vmem:[%s2 + $0x28] sm:$0xff]
    %v54 = vld [vmem:[%s2 + $0x30] sm:$0xff]
    %v55 = vld [vmem:[%s2 + $0x38] sm:$0xff]
    %v56 = vld [vmem:[%s2 + $0x40] sm:$0xff]
    %v57 = vld [vmem:[%s2 + $0x48] sm:$0xff]
    %v58 = vld [vmem:[%s2 + $0x50] sm:$0xff]
    %v59 = vld [vmem:[%s2 + $0x58] sm:$0xff]
    %v60 = vld [vmem:[%s2 + $0x60] sm:$0xf]
    %62 = vset.pattern.permute.xlu0 0
    %63 = vperm.xlu0 %62, %v48
    %v64 = vpop.permute.xlu0 %63
    %67 = vset.pattern.permute.xlu0 0
    %68 = vperm.xlu0 %67, %v49
    %v69 = vpop.permute.xlu0 %68
    %72 = vset.pattern.permute.xlu0 0
    %73 = vperm.xlu0 %72, %v50
    %v74 = vpop.permute.xlu0 %73
    %77 = vset.pattern.permute.xlu0 0
    %78 = vperm.xlu0 %77, %v51
    %v79 = vpop.permute.xlu0 %78
    %82 = vset.pattern.permute.xlu0 0
    %83 = vperm.xlu0 %82, %v52
    %v84 = vpop.permute.xlu0 %83
    %87 = vset.pattern.permute.xlu0 0
    %88 = vperm.xlu0 %87, %v53
    %v89 = vpop.permute.xlu0 %88
    %92 = vset.pattern.permute.xlu0 0
    %93 = vperm.xlu0 %92, %v54
    %v94 = vpop.permute.xlu0 %93
    %97 = vset.pattern.permute.xlu0 0
    %98 = vperm.xlu0 %97, %v55
    %v99 = vpop.permute.xlu0 %98
    %102 = vset.pattern.permute.xlu0 0
    %103 = vperm.xlu0 %102, %v56
    %v104 = vpop.permute.xlu0 %103
    %107 = vset.pattern.permute.xlu0 0
    %108 = vperm.xlu0 %107, %v57
    %v109 = vpop.permute.xlu0 %108
    %112 = vset.pattern.permute.xlu0 0
    %113 = vperm.xlu0 %112, %v58
    %v114 = vpop.permute.xlu0 %113
    %117 = vset.pattern.permute.xlu0 0
    %118 = vperm.xlu0 %117, %v59
    %v119 = vpop.permute.xlu0 %118
    %122 = vset.pattern.permute.xlu0 0
    %123 = vperm.xlu0 %122, %v60
    %v124 = vpop.permute.xlu0 %123
    %v126 = vld [vmem:[%s4] sm:$0xff]
    %v127 = vld [vmem:[%s4 + $0x8] sm:$0xff]
    %v128 = vld [vmem:[%s4 + $0x10] sm:$0xff]
    %v129 = vld [vmem:[%s4 + $0x18] sm:$0xff]
    %v130 = vld [vmem:[%s4 + $0x20] sm:$0xff]
    %v131 = vld [vmem:[%s4 + $0x28] sm:$0xff]
    %v132 = vld [vmem:[%s4 + $0x30] sm:$0x3]
    %134 = vset.pattern.permute.xlu0 0
    %135 = vperm.xlu0 %134, %v126
    %v136 = vpop.permute.xlu0 %135
    %139 = vset.pattern.permute.xlu0 0
    %140 = vperm.xlu0 %139, %v127
    %v141 = vpop.permute.xlu0 %140
    %144 = vset.pattern.permute.xlu0 0
    %145 = vperm.xlu0 %144, %v128
    %v146 = vpop.permute.xlu0 %145
    %149 = vset.pattern.permute.xlu0 0
    %150 = vperm.xlu0 %149, %v129
    %v151 = vpop.permute.xlu0 %150
    %154 = vset.pattern.permute.xlu0 0
    %155 = vperm.xlu0 %154, %v130
    %v156 = vpop.permute.xlu0 %155
    %159 = vset.pattern.permute.xlu0 0
    %160 = vperm.xlu0 %159, %v131
    %v161 = vpop.permute.xlu0 %160
    %164 = vset.pattern.permute.xlu0 0
    %165 = vperm.xlu0 %164, %v132
    %v166 = vpop.permute.xlu0 %165
    %v168 = vld [vmem:[%s6] sm:$0xf]
    %170 = vset.pattern.permute.xlu0 0
    %171 = vperm.xlu0 %170, %v168
    %v172 = vpop.permute.xlu0 %171
    %v174 = vld [vmem:[%s0] sm:$0xff]
    %v175 = vld [vmem:[%s0 + $0x8] sm:$0xff]
    %v176 = vld [vmem:[%s0 + $0x10] sm:$0xff]
    %v177 = vld [vmem:[%s0 + $0x18] sm:$0xff]
    %v178 = vld [vmem:[%s0 + $0x20] sm:$0xff]
    %v179 = vld [vmem:[%s0 + $0x28] sm:$0xff]
    %v180 = vld [vmem:[%s0 + $0x30] sm:$0x3]
    %v181 = vld [vmem:[%s0 + $0x38] sm:$0x3]
    %vm182 = vcmask 211968
    %v184 = vsel %vm182, %v27, 0
    %v187 = vsel %vm182, %v28, 0
    %v190 = vsel %vm182, %v29, 0
    %v193 = vsel %vm182, %v30, 0
    %v196 = vsel %vm182, %v31, 0
    %v199 = vsel %vm182, %v32, 0
    %v202 = vsel %vm182, %v33, 0
    %v205 = vsel %vm182, %v34, 0
    %v208 = vsel %vm182, %v35, 0
    %v211 = vsel %vm182, %v36, 0
    %v214 = vsel %vm182, %v37, 0
    %v217 = vsel %vm182, %v38, 0
    %v220 = vsel %vm182, %v39, 0
    %vm222 = vcmask 1041408
    %v224 = vsel %vm222, %v180, 0
    %v227 = vsel %vm222, %v181, 0
    %v229 = vand.u32 %v175, 4294901760
    %230 = vmatprep.subr.mxu0 %v229
    %v231 = vand.u32 %v174, 4294901760
    %232 = vmatpush1.msra.mxu0 %v231
    %v233 = vand.u32 %v177, 4294901760
    %234 = vmatprep.subr.mxu0 %v233
    %v235 = vand.u32 %v176, 4294901760
    %236 = vmatpush1.msra.mxu0 %v235
    %v237 = vand.u32 %v179, 4294901760
    %238 = vmatprep.subr.mxu0 %v237
    %v239 = vand.u32 %v178, 4294901760
    %240 = vmatpush1.msra.mxu0 %v239
    %v241 = vand.u32 %v227, 4294901760
    %242 = vmatprep.subr.mxu0 %v241
    %v243 = vand.u32 %v224, 4294901760
    %244 = vmatpush1.msra.mxu0 %v243
    %245 = vmatprep.subr.mxu0 0.0
    %246 = vmatpush1.msra.mxu0 0.0
    %247 = vmatprep.subr.mxu0 0.0
    %248 = vmatpush1.msra.mxu0 0.0
    %249 = vmatprep.subr.mxu0 0.0
    %250 = vmatpush1.msra.mxu0 0.0
    %251 = vmatprep.subr.mxu0 0.0
    %252 = vmatpush1.msra.mxu0 0.0
    %253 = vmatprep.subr.mxu0 0.0
    %254 = vmatpush1.msra.mxu0 0.0
    %255 = vmatprep.subr.mxu0 0.0
    %256 = vmatpush1.msra.mxu0 0.0
    %257 = vmatprep.subr.mxu0 0.0
    %258 = vmatpush1.msra.mxu0 0.0
    %259 = vmatprep.subr.mxu0 0.0
    %260 = vmatpush1.msra.mxu0 0.0
    %261 = vmatprep.subr.mxu0 0.0
    %262 = vmatpush1.msra.mxu0 0.0
    %263 = vmatprep.subr.mxu0 0.0
    %264 = vmatpush1.msra.mxu0 0.0
    %265 = vmatprep.subr.mxu0 0.0
    %266 = vmatpush1.msra.mxu0 0.0
    %267 = vmatprep.subr.mxu0 0.0
    %268 = vmatpush1.msra.mxu0 0.0
    %269 = vmatprep.subr.mxu0 0.0
    %270 = vmatpush1.msra.mxu0 0.0
    %271 = vmatprep.subr.mxu0 0.0
    %272 = vmatpush1.msra.mxu0 0.0
    %273 = vmatprep.subr.mxu0 0.0
    %274 = vmatpush1.msra.mxu0 0.0
    %275 = vmatprep.subr.mxu0 0.0
    %276 = vmatpush1.msra.mxu0 0.0
    %277 = vmatprep.subr.mxu0 0.0
    %278 = vmatpush1.msra.mxu0 0.0
    %279 = vmatprep.subr.mxu0 0.0
    %280 = vmatpush1.msra.mxu0 0.0
    %281 = vmatprep.subr.mxu0 0.0
    %282 = vmatpush1.msra.mxu0 0.0
    %283 = vmatprep.subr.mxu0 0.0
    %284 = vmatpush1.msra.mxu0 0.0
    %285 = vmatprep.subr.mxu0 0.0
    %286 = vmatpush1.msra.mxu0 0.0
    %287 = vmatprep.subr.mxu0 0.0
    %288 = vmatpush1.msra.mxu0 0.0
    %289 = vmatprep.subr.mxu0 0.0
    %290 = vmatpush1.msra.mxu0 0.0
    %291 = vmatprep.subr.mxu0 0.0
    %292 = vmatpush1.msra.mxu0 0.0
    %293 = vmatprep.subr.mxu0 0.0
    %294 = vmatpush1.msra.mxu0 0.0
    %295 = vmatprep.subr.mxu0 0.0
    %296 = vmatpush1.msra.mxu0 0.0
    %297 = vmatprep.subr.mxu0 0.0
    %298 = vmatpush1.msra.mxu0 0.0
    %299 = vmatprep.subr.mxu0 0.0
    %300 = vmatpush1.msra.mxu0 0.0
    %301 = vmatprep.mubr.f32.mxu0 0.0
    %v302 = vand.u32 %v184, 4294901760
    %v303 = vsub.f32 %v184, %v302
    %v304 = vand.u32 %v303, 4294901760
    %v305 = vsub.f32 %v303, %v304
    %v306 = vand.u32 %v305, 4294901760
    %307 = vmatmul.mubr.f32.gmra.mrb[0].mxu0 %v306
    %v308 = vpop.f32.mrb[0].mxu0
    %v309 = vadd.f32 %v64, %v308
    %v310 = vpop.f32.mrb[0].mxu0
    %v311 = vadd.f32 %v64, %v310
    %312 = vmatprep.mubr.f32.mxu0 0.0
    %v313 = vand.u32 %v187, 4294901760
    %v314 = vsub.f32 %v187, %v313
    %v315 = vand.u32 %v314, 4294901760
    %v316 = vsub.f32 %v314, %v315
    %v317 = vand.u32 %v316, 4294901760
    %318 = vmatmul.mubr.f32.gmra.mrb[0].mxu0 %v317
    %v319 = vpop.f32.mrb[0].mxu0
    %v320 = vadd.f32 %v69, %v319
    %v321 = vpop.f32.mrb[0].mxu0
    %v322 = vadd.f32 %v69, %v321
    %323 = vmatprep.mubr.f32.mxu0 0.0
    %v324 = vand.u32 %v190, 4294901760
    %v325 = vsub.f32 %v190, %v324
    %v326 = vand.u32 %v325, 4294901760
    %v327 = vsub.f32 %v325, %v326
    %v328 = vand.u32 %v327, 4294901760
    %329 = vmatmul.mubr.f32.gmra.mrb[0].mxu0 %v328
    %v330 = vpop.f32.mrb[0].mxu0
    %v331 = vadd.f32 %v74, %v330
    %v332 = vpop.f32.mrb[0].mxu0
    %v333 = vadd.f32 %v74, %v332
    %334 = vmatprep.mubr.f32.mxu0 0.0
    %v335 = vand.u32 %v193, 4294901760
    %v336 = vsub.f32 %v193, %v335
    %v337 = vand.u32 %v336, 4294901760
    %v338 = vsub.f32 %v336, %v337
    %v339 = vand.u32 %v338, 4294901760
    %340 = vmatmul.mubr.f32.gmra.mrb[0].mxu0 %v339
    %v341 = vpop.f32.mrb[0].mxu0
    %v342 = vadd.f32 %v79, %v341
    %v343 = vpop.f32.mrb[0].mxu0
    %v344 = vadd.f32 %v79, %v343
    %345 = vmatprep.mubr.f32.mxu0 0.0
    %v346 = vand.u32 %v196, 4294901760
    %v347 = vsub.f32 %v196, %v346
    %v348 = vand.u32 %v347, 4294901760
    %v349 = vsub.f32 %v347, %v348
    %v350 = vand.u32 %v349, 4294901760
    %351 = vmatmul.mubr.f32.gmra.mrb[0].mxu0 %v350
    %v352 = vpop.f32.mrb[0].mxu0
    %v353 = vadd.f32 %v84, %v352
    %v354 = vpop.f32.mrb[0].mxu0
    %v355 = vadd.f32 %v84, %v354
    %356 = vmatprep.mubr.f32.mxu0 0.0
    %v357 = vand.u32 %v199, 4294901760
    %v358 = vsub.f32 %v199, %v357
    %v359 = vand.u32 %v358, 4294901760
    %v360 = vsub.f32 %v358, %v359
    %v361 = vand.u32 %v360, 4294901760
    %362 = vmatmul.mubr.f32.gmra.mrb[0].mxu0 %v361
    %v363 = vpop.f32.mrb[0].mxu0
    %v364 = vadd.f32 %v89, %v363
    %v365 = vpop.f32.mrb[0].mxu0
    %v366 = vadd.f32 %v89, %v365
    %367 = vmatprep.mubr.f32.mxu0 0.0
    %v368 = vand.u32 %v202, 4294901760
    %v369 = vsub.f32 %v202, %v368
    %v370 = vand.u32 %v369, 4294901760
    %v371 = vsub.f32 %v369, %v370
    %v372 = vand.u32 %v371, 4294901760
    %373 = vmatmul.mubr.f32.gmra.mrb[0].mxu0 %v372
    %v374 = vpop.f32.mrb[0].mxu0
    %v375 = vadd.f32 %v94, %v374
    %v376 = vpop.f32.mrb[0].mxu0
    %v377 = vadd.f32 %v94, %v376
    %378 = vmatprep.mubr.f32.mxu0 0.0
    %v379 = vand.u32 %v205, 4294901760
    %v380 = vsub.f32 %v205, %v379
    %v381 = vand.u32 %v380, 4294901760
    %v382 = vsub.f32 %v380, %v381
    %v383 = vand.u32 %v382, 4294901760
    %384 = vmatmul.mubr.f32.gmra.mrb[0].mxu0 %v383
    %v385 = vpop.f32.mrb[0].mxu0
    %v386 = vadd.f32 %v99, %v385
    %v387 = vpop.f32.mrb[0].mxu0
    %v388 = vadd.f32 %v99, %v387
    %389 = vmatprep.mubr.f32.mxu0 0.0
    %v390 = vand.u32 %v208, 4294901760
    %v391 = vsub.f32 %v208, %v390
    %v392 = vand.u32 %v391, 4294901760
    %v393 = vsub.f32 %v391, %v392
    %v394 = vand.u32 %v393, 4294901760
    %395 = vmatmul.mubr.f32.gmra.mrb[0].mxu0 %v394
    %v396 = vpop.f32.mrb[0].mxu0
    %v397 = vadd.f32 %v104, %v396
    %v398 = vpop.f32.mrb[0].mxu0
    %v399 = vadd.f32 %v104, %v398
    %400 = vmatprep.mubr.f32.mxu0 0.0
    %v401 = vand.u32 %v211, 4294901760
    %v402 = vsub.f32 %v211, %v401
    %v403 = vand.u32 %v402, 4294901760
    %v404 = vsub.f32 %v402, %v403
    %v405 = vand.u32 %v404, 4294901760
    %406 = vmatmul.mubr.f32.gmra.mrb[0].mxu0 %v405
    %v407 = vpop.f32.mrb[0].mxu0
    %v408 = vadd.f32 %v109, %v407
    %v409 = vpop.f32.mrb[0].mxu0
    %v410 = vadd.f32 %v109, %v409
    %411 = vmatprep.mubr.f32.mxu0 0.0
    %v412 = vand.u32 %v214, 4294901760
    %v413 = vsub.f32 %v214, %v412
    %v414 = vand.u32 %v413, 4294901760
    %v415 = vsub.f32 %v413, %v414
    %v416 = vand.u32 %v415, 4294901760
    %417 = vmatmul.mubr.f32.gmra.mrb[0].mxu0 %v416
    %v418 = vpop.f32.mrb[0].mxu0
    %v419 = vadd.f32 %v114, %v418
    %v420 = vpop.f32.mrb[0].mxu0
    %v421 = vadd.f32 %v114, %v420
    %422 = vmatprep.mubr.f32.mxu0 0.0
    %v423 = vand.u32 %v217, 4294901760
    %v424 = vsub.f32 %v217, %v423
    %v425 = vand.u32 %v424, 4294901760
    %v426 = vsub.f32 %v424, %v425
    %v427 = vand.u32 %v426, 4294901760
    %428 = vmatmul.mubr.f32.gmra.mrb[0].mxu0 %v427
    %v429 = vpop.f32.mrb[0].mxu0
    %v430 = vadd.f32 %v119, %v429
    %v431 = vpop.f32.mrb[0].mxu0
    %v432 = vadd.f32 %v119, %v431
    %433 = vmatprep.mubr.f32.mxu0 0.0
    %v434 = vand.u32 %v220, 4294901760
    %v435 = vsub.f32 %v220, %v434
    %v436 = vand.u32 %v435, 4294901760
    %v437 = vsub.f32 %v435, %v436
    %v438 = vand.u32 %v437, 4294901760
    %439 = vmatmul.mubr.f32.gmra.mrb[0].mxu0 %v438
    %v440 = vpop.f32.mrb[0].mxu0
    %v441 = vadd.f32 %v124, %v440
    %v442 = vpop.f32.mrb[0].mxu0
    %v443 = vadd.f32 %v124, %v442
    %444 = vdwg.mxu0
    %v445 = vand.u32 %v175, 4294901760
    %v446 = vsub.f32 %v175, %v445
    %v447 = vand.u32 %v446, 4294901760
    %v448 = vsub.f32 %v446, %v447
    %v449 = vand.u32 %v448, 4294901760
    %450 = vmatprep.subr.mxu0 %v449
    %v451 = vand.u32 %v174, 4294901760
    %v452 = vsub.f32 %v174, %v451
    %v453 = vand.u32 %v452, 4294901760
    %v454 = vsub.f32 %v452, %v453
    %v455 = vand.u32 %v454, 4294901760
    %456 = vmatpush1.msra.mxu0 %v455
    %v457 = vand.u32 %v177, 4294901760
    %v458 = vsub.f32 %v177, %v457
    %v459 = vand.u32 %v458, 4294901760
    %v460 = vsub.f32 %v458, %v459
    %v461 = vand.u32 %v460, 4294901760
    %462 = vmatprep.subr.mxu0 %v461
    %v463 = vand.u32 %v176, 4294901760
    %v464 = vsub.f32 %v176, %v463
    %v465 = vand.u32 %v464, 4294901760
    %v466 = vsub.f32 %v464, %v465
    %v467 = vand.u32 %v466, 4294901760
    %468 = vmatpush1.msra.mxu0 %v467
    %v469 = vand.u32 %v179, 4294901760
    %v470 = vsub.f32 %v179, %v469
    %v471 = vand.u32 %v470, 4294901760
    %v472 = vsub.f32 %v470, %v471
    %v473 = vand.u32 %v472, 4294901760
    %474 = vmatprep.subr.mxu0 %v473
    %v475 = vand.u32 %v178, 4294901760
    %v476 = vsub.f32 %v178, %v475
    %v477 = vand.u32 %v476, 4294901760
    %v478 = vsub.f32 %v476, %v477
    %v479 = vand.u32 %v478, 4294901760
    %480 = vmatpush1.msra.mxu0 %v479
    %v481 = vand.u32 %v227, 4294901760
    %v482 = vsub.f32 %v227, %v481
    %v483 = vand.u32 %v482, 4294901760
    %v484 = vsub.f32 %v482, %v483
    %v485 = vand.u32 %v484, 4294901760
    %486 = vmatprep.subr.mxu0 %v485
    %v487 = vand.u32 %v224, 4294901760
    %v488 = vsub.f32 %v224, %v487
    %v489 = vand.u32 %v488, 4294901760
    %v490 = vsub.f32 %v488, %v489
    %v491 = vand.u32 %v490, 4294901760
    %492 = vmatpush1.msra.mxu0 %v491
    %493 = vmatprep.subr.mxu0 0.0
    %494 = vmatpush1.msra.mxu0 0.0
    %495 = vmatprep.subr.mxu0 0.0
    %496 = vmatpush1.msra.mxu0 0.0
    %497 = vmatprep.subr.mxu0 0.0
    %498 = vmatpush1.msra.mxu0 0.0
    %499 = vmatprep.subr.mxu0 0.0
    %500 = vmatpush1.msra.mxu0 0.0
    %501 = vmatprep.subr.mxu0 0.0
    %502 = vmatpush1.msra.mxu0 0.0
    %503 = vmatprep.subr.mxu0 0.0
    %504 = vmatpush1.msra.mxu0 0.0
    %505 = vmatprep.subr.mxu0 0.0
    %506 = vmatpush1.msra.mxu0 0.0
    %507 = vmatprep.subr.mxu0 0.0
    %508 = vmatpush1.msra.mxu0 0.0
    %509 = vmatprep.subr.mxu0 0.0
    %510 = vmatpush1.msra.mxu0 0.0
    %511 = vmatprep.subr.mxu0 0.0
    %512 = vmatpush1.msra.mxu0 0.0
    %513 = vmatprep.subr.mxu0 0.0
    %514 = vmatpush1.msra.mxu0 0.0
    %515 = vmatprep.subr.mxu0 0.0
    %516 = vmatpush1.msra.mxu0 0.0
    %517 = vmatprep.subr.mxu0 0.0
    %518 = vmatpush1.msra.mxu0 0.0
    %519 = vmatprep.subr.mxu0 0.0
    %520 = vmatpush1.msra.mxu0 0.0
    %521 = vmatprep.subr.mxu0 0.0
    %522 = vmatpush1.msra.mxu0 0.0
    %523 = vmatprep.subr.mxu0 0.0
    %524 = vmatpush1.msra.mxu0 0.0
    %525 = vmatprep.subr.mxu0 0.0
    %526 = vmatpush1.msra.mxu0 0.0
    %527 = vmatprep.subr.mxu0 0.0
    %528 = vmatpush1.msra.mxu0 0.0
    %529 = vmatprep.subr.mxu0 0.0
    %530 = vmatpush1.msra.mxu0 0.0
    %531 = vmatprep.subr.mxu0 0.0
    %532 = vmatpush1.msra.mxu0 0.0
    %533 = vmatprep.subr.mxu0 0.0
    %534 = vmatpush1.msra.mxu0 0.0
    %535 = vmatprep.subr.mxu0 0.0
    %536 = vmatpush1.msra.mxu0 0.0
    %537 = vmatprep.subr.mxu0 0.0
    %538 = vmatpush1.msra.mxu0 0.0
    %539 = vmatprep.subr.mxu0 0.0
    %540 = vmatpush1.msra.mxu0 0.0
    %541 = vmatprep.subr.mxu0 0.0
    %542 = vmatpush1.msra.mxu0 0.0
    %543 = vmatprep.subr.mxu0 0.0
    %544 = vmatpush1.msra.mxu0 0.0
    %545 = vmatprep.subr.mxu0 0.0
    %546 = vmatpush1.msra.mxu0 0.0
    %547 = vmatprep.subr.mxu0 0.0
    %548 = vmatpush1.msra.mxu0 0.0
    %549 = vmatprep.mubr.f32.mxu0 0.0
    %v550 = vand.u32 %v184, 4294901760
    %551 = vmatmul.mubr.f32.gmra.mrb[0].mxu0 %v550
    %v552 = vpop.f32.mrb[0].mxu0
    %v553 = vadd.f32 %v309, %v552
    %v554 = vpop.f32.mrb[0].mxu0
    %v555 = vadd.f32 %v311, %v554
    %556 = vmatprep.mubr.f32.mxu0 0.0
    %v557 = vand.u32 %v187, 4294901760
    %558 = vmatmul.mubr.f32.gmra.mrb[0].mxu0 %v557
    %v559 = vpop.f32.mrb[0].mxu0
    %v560 = vadd.f32 %v320, %v559
    %v561 = vpop.f32.mrb[0].mxu0
    %v562 = vadd.f32 %v322, %v561
    %563 = vmatprep.mubr.f32.mxu0 0.0
    %v564 = vand.u32 %v190, 4294901760
    %565 = vmatmul.mubr.f32.gmra.mrb[0].mxu0 %v564
    %v566 = vpop.f32.mrb[0].mxu0
    %v567 = vadd.f32 %v331, %v566
    %v568 = vpop.f32.mrb[0].mxu0
    %v569 = vadd.f32 %v333, %v568
    %570 = vmatprep.mubr.f32.mxu0 0.0
    %v571 = vand.u32 %v193, 4294901760
    %572 = vmatmul.mubr.f32.gmra.mrb[0].mxu0 %v571
    %v573 = vpop.f32.mrb[0].mxu0
    %v574 = vadd.f32 %v342, %v573
    %v575 = vpop.f32.mrb[0].mxu0
    %v576 = vadd.f32 %v344, %v575
    %577 = vmatprep.mubr.f32.mxu0 0.0
    %v578 = vand.u32 %v196, 4294901760
    %579 = vmatmul.mubr.f32.gmra.mrb[0].mxu0 %v578
    %v580 = vpop.f32.mrb[0].mxu0
    %v581 = vadd.f32 %v353, %v580
    %v582 = vpop.f32.mrb[0].mxu0
    %v583 = vadd.f32 %v355, %v582
    %584 = vmatprep.mubr.f32.mxu0 0.0
    %v585 = vand.u32 %v199, 4294901760
    %586 = vmatmul.mubr.f32.gmra.mrb[0].mxu0 %v585
    %v587 = vpop.f32.mrb[0].mxu0
    %v588 = vadd.f32 %v364, %v587
    %v589 = vpop.f32.mrb[0].mxu0
    %v590 = vadd.f32 %v366, %v589
    %591 = vmatprep.mubr.f32.mxu0 0.0
    %v592 = vand.u32 %v202, 4294901760
    %593 = vmatmul.mubr.f32.gmra.mrb[0].mxu0 %v592
    %v594 = vpop.f32.mrb[0].mxu0
    %v595 = vadd.f32 %v375, %v594
    %v596 = vpop.f32.mrb[0].mxu0
    %v597 = vadd.f32 %v377, %v596
    %598 = vmatprep.mubr.f32.mxu0 0.0
    %v599 = vand.u32 %v205, 4294901760
    %600 = vmatmul.mubr.f32.gmra.mrb[0].mxu0 %v599
    %v601 = vpop.f32.mrb[0].mxu0
    %v602 = vadd.f32 %v386, %v601
    %v603 = vpop.f32.mrb[0].mxu0
    %v604 = vadd.f32 %v388, %v603
    %605 = vmatprep.mubr.f32.mxu0 0.0
    %v606 = vand.u32 %v208, 4294901760
    %607 = vmatmul.mubr.f32.gmra.mrb[0].mxu0 %v606
    %v608 = vpop.f32.mrb[0].mxu0
    %v609 = vadd.f32 %v397, %v608
    %v610 = vpop.f32.mrb[0].mxu0
    %v611 = vadd.f32 %v399, %v610
    %612 = vmatprep.mubr.f32.mxu0 0.0
    %v613 = vand.u32 %v211, 4294901760
    %614 = vmatmul.mubr.f32.gmra.mrb[0].mxu0 %v613
    %v615 = vpop.f32.mrb[0].mxu0
    %v616 = vadd.f32 %v408, %v615
    %v617 = vpop.f32.mrb[0].mxu0
    %v618 = vadd.f32 %v410, %v617
    %619 = vmatprep.mubr.f32.mxu0 0.0
    %v620 = vand.u32 %v214, 4294901760
    %621 = vmatmul.mubr.f32.gmra.mrb[0].mxu0 %v620
    %v622 = vpop.f32.mrb[0].mxu0
    %v623 = vadd.f32 %v419, %v622
    %v624 = vpop.f32.mrb[0].mxu0
    %v625 = vadd.f32 %v421, %v624
    %626 = vmatprep.mubr.f32.mxu0 0.0
    %v627 = vand.u32 %v217, 4294901760
    %628 = vmatmul.mubr.f32.gmra.mrb[0].mxu0 %v627
    %v629 = vpop.f32.mrb[0].mxu0
    %v630 = vadd.f32 %v430, %v629
    %v631 = vpop.f32.mrb[0].mxu0
    %v632 = vadd.f32 %v432, %v631
    %633 = vmatprep.mubr.f32.mxu0 0.0
    %v634 = vand.u32 %v220, 4294901760
    %635 = vmatmul.mubr.f32.gmra.mrb[0].mxu0 %v634
    %v636 = vpop.f32.mrb[0].mxu0
    %v637 = vadd.f32 %v441, %v636
    %v638 = vpop.f32.mrb[0].mxu0
    %v639 = vadd.f32 %v443, %v638
    %640 = vdwg.mxu0
    %v641 = vand.u32 %v175, 4294901760
    %v642 = vsub.f32 %v175, %v641
    %643 = vmatprep.subr.mxu0 %v642
    %v644 = vand.u32 %v174, 4294901760
    %v645 = vsub.f32 %v174, %v644
    %646 = vmatpush1.msra.mxu0 %v645
    %v647 = vand.u32 %v177, 4294901760
    %v648 = vsub.f32 %v177, %v647
    %649 = vmatprep.subr.mxu0 %v648
    %v650 = vand.u32 %v176, 4294901760
    %v651 = vsub.f32 %v176, %v650
    %652 = vmatpush1.msra.mxu0 %v651
    %v653 = vand.u32 %v179, 4294901760
    %v654 = vsub.f32 %v179, %v653
    %655 = vmatprep.subr.mxu0 %v654
    %v656 = vand.u32 %v178, 4294901760
    %v657 = vsub.f32 %v178, %v656
    %658 = vmatpush1.msra.mxu0 %v657
    %v659 = vand.u32 %v227, 4294901760
    %v660 = vsub.f32 %v227, %v659
    %661 = vmatprep.subr.mxu0 %v660
    %v662 = vand.u32 %v224, 4294901760
    %v663 = vsub.f32 %v224, %v662
    %664 = vmatpush1.msra.mxu0 %v663
    %665 = vmatprep.subr.mxu0 0.0
    %666 = vmatpush1.msra.mxu0 0.0
    %667 = vmatprep.subr.mxu0 0.0
    %668 = vmatpush1.msra.mxu0 0.0
    %669 = vmatprep.subr.mxu0 0.0
    %670 = vmatpush1.msra.mxu0 0.0
    %671 = vmatprep.subr.mxu0 0.0
    %672 = vmatpush1.msra.mxu0 0.0
    %673 = vmatprep.subr.mxu0 0.0
    %674 = vmatpush1.msra.mxu0 0.0
    %675 = vmatprep.subr.mxu0 0.0
    %676 = vmatpush1.msra.mxu0 0.0
    %677 = vmatprep.subr.mxu0 0.0
    %678 = vmatpush1.msra.mxu0 0.0
    %679 = vmatprep.subr.mxu0 0.0
    %680 = vmatpush1.msra.mxu0 0.0
    %681 = vmatprep.subr.mxu0 0.0
    %682 = vmatpush1.msra.mxu0 0.0
    %683 = vmatprep.subr.mxu0 0.0
    %684 = vmatpush1.msra.mxu0 0.0
    %685 = vmatprep.subr.mxu0 0.0
    %686 = vmatpush1.msra.mxu0 0.0
    %687 = vmatprep.subr.mxu0 0.0
    %688 = vmatpush1.msra.mxu0 0.0
    %689 = vmatprep.subr.mxu0 0.0
    %690 = vmatpush1.msra.mxu0 0.0
    %691 = vmatprep.subr.mxu0 0.0
    %692 = vmatpush1.msra.mxu0 0.0
    %693 = vmatprep.subr.mxu0 0.0
    %694 = vmatpush1.msra.mxu0 0.0
    %695 = vmatprep.subr.mxu0 0.0
    %696 = vmatpush1.msra.mxu0 0.0
    %697 = vmatprep.subr.mxu0 0.0
    %698 = vmatpush1.msra.mxu0 0.0
    %699 = vmatprep.subr.mxu0 0.0
    %700 = vmatpush1.msra.mxu0 0.0
    %701 = vmatprep.subr.mxu0 0.0
    %702 = vmatpush1.msra.mxu0 0.0
    %703 = vmatprep.subr.mxu0 0.0
    %704 = vmatpush1.msra.mxu0 0.0
    %705 = vmatprep.subr.mxu0 0.0
    %706 = vmatpush1.msra.mxu0 0.0
    %707 = vmatprep.subr.mxu0 0.0
    %708 = vmatpush1.msra.mxu0 0.0
    %709 = vmatprep.subr.mxu0 0.0
    %710 = vmatpush1.msra.mxu0 0.0
    %711 = vmatprep.subr.mxu0 0.0
    %712 = vmatpush1.msra.mxu0 0.0
    %713 = vmatprep.subr.mxu0 0.0
    %714 = vmatpush1.msra.mxu0 0.0
    %715 = vmatprep.subr.mxu0 0.0
    %716 = vmatpush1.msra.mxu0 0.0
    %717 = vmatprep.subr.mxu0 0.0
    %718 = vmatpush1.msra.mxu0 0.0
    %719 = vmatprep.subr.mxu0 0.0
    %720 = vmatpush1.msra.mxu0 0.0
    %721 = vmatprep.mubr.f32.mxu0 0.0
    %v722 = vand.u32 %v184, 4294901760
    %v723 = vsub.f32 %v184, %v722
    %724 = vmatmul.mubr.f32.gmra.mrb[0].mxu0 %v723
    %v725 = vpop.f32.mrb[0].mxu0
    %v726 = vadd.f32 %v553, %v725
    %v727 = vpop.f32.mrb[0].mxu0
    %v728 = vadd.f32 %v555, %v727
    %729 = vmatprep.mubr.f32.mxu0 0.0
    %v730 = vand.u32 %v187, 4294901760
    %v731 = vsub.f32 %v187, %v730
    %732 = vmatmul.mubr.f32.gmra.mrb[0].mxu0 %v731
    %v733 = vpop.f32.mrb[0].mxu0
    %v734 = vadd.f32 %v560, %v733
    %v735 = vpop.f32.mrb[0].mxu0
    %v736 = vadd.f32 %v562, %v735
    %737 = vmatprep.mubr.f32.mxu0 0.0
    %v738 = vand.u32 %v190, 4294901760
    %v739 = vsub.f32 %v190, %v738
    %740 = vmatmul.mubr.f32.gmra.mrb[0].mxu0 %v739
    %v741 = vpop.f32.mrb[0].mxu0
    %v742 = vadd.f32 %v567, %v741
    %v743 = vpop.f32.mrb[0].mxu0
    %v744 = vadd.f32 %v569, %v743
    %745 = vmatprep.mubr.f32.mxu0 0.0
    %v746 = vand.u32 %v193, 4294901760
    %v747 = vsub.f32 %v193, %v746
    %748 = vmatmul.mubr.f32.gmra.mrb[0].mxu0 %v747
    %v749 = vpop.f32.mrb[0].mxu0
    %v750 = vadd.f32 %v574, %v749
    %v751 = vpop.f32.mrb[0].mxu0
    %v752 = vadd.f32 %v576, %v751
    %753 = vmatprep.mubr.f32.mxu0 0.0
    %v754 = vand.u32 %v196, 4294901760
    %v755 = vsub.f32 %v196, %v754
    %756 = vmatmul.mubr.f32.gmra.mrb[0].mxu0 %v755
    %v757 = vpop.f32.mrb[0].mxu0
    %v758 = vadd.f32 %v581, %v757
    %v759 = vpop.f32.mrb[0].mxu0
    %v760 = vadd.f32 %v583, %v759
    %761 = vmatprep.mubr.f32.mxu0 0.0
    %v762 = vand.u32 %v199, 4294901760
    %v763 = vsub.f32 %v199, %v762
    %764 = vmatmul.mubr.f32.gmra.mrb[0].mxu0 %v763
    %v765 = vpop.f32.mrb[0].mxu0
    %v766 = vadd.f32 %v588, %v765
    %v767 = vpop.f32.mrb[0].mxu0
    %v768 = vadd.f32 %v590, %v767
    %769 = vmatprep.mubr.f32.mxu0 0.0
    %v770 = vand.u32 %v202, 4294901760
    %v771 = vsub.f32 %v202, %v770
    %772 = vmatmul.mubr.f32.gmra.mrb[0].mxu0 %v771
    %v773 = vpop.f32.mrb[0].mxu0
    %v774 = vadd.f32 %v595, %v773
    %v775 = vpop.f32.mrb[0].mxu0
    %v776 = vadd.f32 %v597, %v775
    %777 = vmatprep.mubr.f32.mxu0 0.0
    %v778 = vand.u32 %v205, 4294901760
    %v779 = vsub.f32 %v205, %v778
    %780 = vmatmul.mubr.f32.gmra.mrb[0].mxu0 %v779
    %v781 = vpop.f32.mrb[0].mxu0
    %v782 = vadd.f32 %v602, %v781
    %v783 = vpop.f32.mrb[0].mxu0
    %v784 = vadd.f32 %v604, %v783
    %785 = vmatprep.mubr.f32.mxu0 0.0
    %v786 = vand.u32 %v208, 4294901760
    %v787 = vsub.f32 %v208, %v786
    %788 = vmatmul.mubr.f32.gmra.mrb[0].mxu0 %v787
    %v789 = vpop.f32.mrb[0].mxu0
    %v790 = vadd.f32 %v609, %v789
    %v791 = vpop.f32.mrb[0].mxu0
    %v792 = vadd.f32 %v611, %v791
    %793 = vmatprep.mubr.f32.mxu0 0.0
    %v794 = vand.u32 %v211, 4294901760
    %v795 = vsub.f32 %v211, %v794
    %796 = vmatmul.mubr.f32.gmra.mrb[0].mxu0 %v795
    %v797 = vpop.f32.mrb[0].mxu0
    %v798 = vadd.f32 %v616, %v797
    %v799 = vpop.f32.mrb[0].mxu0
    %v800 = vadd.f32 %v618, %v799
    %801 = vmatprep.mubr.f32.mxu0 0.0
    %v802 = vand.u32 %v214, 4294901760
    %v803 = vsub.f32 %v214, %v802
    %804 = vmatmul.mubr.f32.gmra.mrb[0].mxu0 %v803
    %v805 = vpop.f32.mrb[0].mxu0
    %v806 = vadd.f32 %v623, %v805
    %v807 = vpop.f32.mrb[0].mxu0
    %v808 = vadd.f32 %v625, %v807
    %809 = vmatprep.mubr.f32.mxu0 0.0
    %v810 = vand.u32 %v217, 4294901760
    %v811 = vsub.f32 %v217, %v810
    %812 = vmatmul.mubr.f32.gmra.mrb[0].mxu0 %v811
    %v813 = vpop.f32.mrb[0].mxu0
    %v814 = vadd.f32 %v630, %v813
    %v815 = vpop.f32.mrb[0].mxu0
    %v816 = vadd.f32 %v632, %v815
    %817 = vmatprep.mubr.f32.mxu0 0.0
    %v818 = vand.u32 %v220, 4294901760
    %v819 = vsub.f32 %v220, %v818
    %820 = vmatmul.mubr.f32.gmra.mrb[0].mxu0 %v819
    %v821 = vpop.f32.mrb[0].mxu0
    %v822 = vadd.f32 %v637, %v821
    %v823 = vpop.f32.mrb[0].mxu0
    %v824 = vadd.f32 %v639, %v823
    %825 = vdwg.mxu0
    %v826 = vand.u32 %v175, 4294901760
    %827 = vmatprep.subr.mxu0 %v826
    %v828 = vand.u32 %v174, 4294901760
    %829 = vmatpush1.msra.mxu0 %v828
    %v830 = vand.u32 %v177, 4294901760
    %831 = vmatprep.subr.mxu0 %v830
    %v832 = vand.u32 %v176, 4294901760
    %833 = vmatpush1.msra.mxu0 %v832
    %v834 = vand.u32 %v179, 4294901760
    %835 = vmatprep.subr.mxu0 %v834
    %v836 = vand.u32 %v178, 4294901760
    %837 = vmatpush1.msra.mxu0 %v836
    %v838 = vand.u32 %v227, 4294901760
    %839 = vmatprep.subr.mxu0 %v838
    %v840 = vand.u32 %v224, 4294901760
    %841 = vmatpush1.msra.mxu0 %v840
    %842 = vmatprep.subr.mxu0 0.0
    %843 = vmatpush1.msra.mxu0 0.0
    %844 = vmatprep.subr.mxu0 0.0
    %845 = vmatpush1.msra.mxu0 0.0
    %846 = vmatprep.subr.mxu0 0.0
    %847 = vmatpush1.msra.mxu0 0.0
    %848 = vmatprep.subr.mxu0 0.0
    %849 = vmatpush1.msra.mxu0 0.0
    %850 = vmatprep.subr.mxu0 0.0
    %851 = vmatpush1.msra.mxu0 0.0
    %852 = vmatprep.subr.mxu0 0.0
    %853 = vmatpush1.msra.mxu0 0.0
    %854 = vmatprep.subr.mxu0 0.0
    %855 = vmatpush1.msra.mxu0 0.0
    %856 = vmatprep.subr.mxu0 0.0
    %857 = vmatpush1.msra.mxu0 0.0
    %858 = vmatprep.subr.mxu0 0.0
    %859 = vmatpush1.msra.mxu0 0.0
    %860 = vmatprep.subr.mxu0 0.0
    %861 = vmatpush1.msra.mxu0 0.0
    %862 = vmatprep.subr.mxu0 0.0
    %863 = vmatpush1.msra.mxu0 0.0
    %864 = vmatprep.subr.mxu0 0.0
    %865 = vmatpush1.msra.mxu0 0.0
    %866 = vmatprep.subr.mxu0 0.0
    %867 = vmatpush1.msra.mxu0 0.0
    %868 = vmatprep.subr.mxu0 0.0
    %869 = vmatpush1.msra.mxu0 0.0
    %870 = vmatprep.subr.mxu0 0.0
    %871 = vmatpush1.msra.mxu0 0.0
    %872 = vmatprep.subr.mxu0 0.0
    %873 = vmatpush1.msra.mxu0 0.0
    %874 = vmatprep.subr.mxu0 0.0
    %875 = vmatpush1.msra.mxu0 0.0
    %876 = vmatprep.subr.mxu0 0.0
    %877 = vmatpush1.msra.mxu0 0.0
    %878 = vmatprep.subr.mxu0 0.0
    %879 = vmatpush1.msra.mxu0 0.0
    %880 = vmatprep.subr.mxu0 0.0
    %881 = vmatpush1.msra.mxu0 0.0
    %882 = vmatprep.subr.mxu0 0.0
    %883 = vmatpush1.msra.mxu0 0.0
    %884 = vmatprep.subr.mxu0 0.0
    %885 = vmatpush1.msra.mxu0 0.0
    %886 = vmatprep.subr.mxu0 0.0
    %887 = vmatpush1.msra.mxu0 0.0
    %888 = vmatprep.subr.mxu0 0.0
    %889 = vmatpush1.msra.mxu0 0.0
    %890 = vmatprep.subr.mxu0 0.0
    %891 = vmatpush1.msra.mxu0 0.0
    %892 = vmatprep.subr.mxu0 0.0
    %893 = vmatpush1.msra.mxu0 0.0
    %894 = vmatprep.subr.mxu0 0.0
    %895 = vmatpush1.msra.mxu0 0.0
    %896 = vmatprep.subr.mxu0 0.0
    %897 = vmatpush1.msra.mxu0 0.0
    %898 = vmatprep.mubr.f32.mxu0 0.0
    %v899 = vand.u32 %v184, 4294901760
    %v900 = vsub.f32 %v184, %v899
    %v901 = vand.u32 %v900, 4294901760
    %902 = vmatmul.mubr.f32.gmra.mrb[0].mxu0 %v901
    %v903 = vpop.f32.mrb[0].mxu0
    %v904 = vadd.f32 %v726, %v903
    %v905 = vpop.f32.mrb[0].mxu0
    %v906 = vadd.f32 %v728, %v905
    %907 = vmatprep.mubr.f32.mxu0 0.0
    %v908 = vand.u32 %v187, 4294901760
    %v909 = vsub.f32 %v187, %v908
    %v910 = vand.u32 %v909, 4294901760
    %911 = vmatmul.mubr.f32.gmra.mrb[0].mxu0 %v910
    %v912 = vpop.f32.mrb[0].mxu0
    %v913 = vadd.f32 %v734, %v912
    %v914 = vpop.f32.mrb[0].mxu0
    %v915 = vadd.f32 %v736, %v914
    %916 = vmatprep.mubr.f32.mxu0 0.0
    %v917 = vand.u32 %v190, 4294901760
    %v918 = vsub.f32 %v190, %v917
    %v919 = vand.u32 %v918, 4294901760
    %920 = vmatmul.mubr.f32.gmra.mrb[0].mxu0 %v919
    %v921 = vpop.f32.mrb[0].mxu0
    %v922 = vadd.f32 %v742, %v921
    %v923 = vpop.f32.mrb[0].mxu0
    %v924 = vadd.f32 %v744, %v923
    %925 = vmatprep.mubr.f32.mxu0 0.0
    %v926 = vand.u32 %v193, 4294901760
    %v927 = vsub.f32 %v193, %v926
    %v928 = vand.u32 %v927, 4294901760
    %929 = vmatmul.mubr.f32.gmra.mrb[0].mxu0 %v928
    %v930 = vpop.f32.mrb[0].mxu0
    %v931 = vadd.f32 %v750, %v930
    %v932 = vpop.f32.mrb[0].mxu0
    %v933 = vadd.f32 %v752, %v932
    %934 = vmatprep.mubr.f32.mxu0 0.0
    %v935 = vand.u32 %v196, 4294901760
    %v936 = vsub.f32 %v196, %v935
    %v937 = vand.u32 %v936, 4294901760
    %938 = vmatmul.mubr.f32.gmra.mrb[0].mxu0 %v937
    %v939 = vpop.f32.mrb[0].mxu0
    %v940 = vadd.f32 %v758, %v939
    %v941 = vpop.f32.mrb[0].mxu0
    %v942 = vadd.f32 %v760, %v941
    %943 = vmatprep.mubr.f32.mxu0 0.0
    %v944 = vand.u32 %v199, 4294901760
    %v945 = vsub.f32 %v199, %v944
    %v946 = vand.u32 %v945, 4294901760
    %947 = vmatmul.mubr.f32.gmra.mrb[0].mxu0 %v946
    %v948 = vpop.f32.mrb[0].mxu0
    %v949 = vadd.f32 %v766, %v948
    %v950 = vpop.f32.mrb[0].mxu0
    %v951 = vadd.f32 %v768, %v950
    %952 = vmatprep.mubr.f32.mxu0 0.0
    %v953 = vand.u32 %v202, 4294901760
    %v954 = vsub.f32 %v202, %v953
    %v955 = vand.u32 %v954, 4294901760
    %956 = vmatmul.mubr.f32.gmra.mrb[0].mxu0 %v955
    %v957 = vpop.f32.mrb[0].mxu0
    %v958 = vadd.f32 %v774, %v957
    %v959 = vpop.f32.mrb[0].mxu0
    %v960 = vadd.f32 %v776, %v959
    %961 = vmatprep.mubr.f32.mxu0 0.0
    %v962 = vand.u32 %v205, 4294901760
    %v963 = vsub.f32 %v205, %v962
    %v964 = vand.u32 %v963, 4294901760
    %965 = vmatmul.mubr.f32.gmra.mrb[0].mxu0 %v964
    %v966 = vpop.f32.mrb[0].mxu0
    %v967 = vadd.f32 %v782, %v966
    %v968 = vpop.f32.mrb[0].mxu0
    %v969 = vadd.f32 %v784, %v968
    %970 = vmatprep.mubr.f32.mxu0 0.0
    %v971 = vand.u32 %v208, 4294901760
    %v972 = vsub.f32 %v208, %v971
    %v973 = vand.u32 %v972, 4294901760
    %974 = vmatmul.mubr.f32.gmra.mrb[0].mxu0 %v973
    %v975 = vpop.f32.mrb[0].mxu0
    %v976 = vadd.f32 %v790, %v975
    %v977 = vpop.f32.mrb[0].mxu0
    %v978 = vadd.f32 %v792, %v977
    %979 = vmatprep.mubr.f32.mxu0 0.0
    %v980 = vand.u32 %v211, 4294901760
    %v981 = vsub.f32 %v211, %v980
    %v982 = vand.u32 %v981, 4294901760
    %983 = vmatmul.mubr.f32.gmra.mrb[0].mxu0 %v982
    %v984 = vpop.f32.mrb[0].mxu0
    %v985 = vadd.f32 %v798, %v984
    %v986 = vpop.f32.mrb[0].mxu0
    %v987 = vadd.f32 %v800, %v986
    %988 = vmatprep.mubr.f32.mxu0 0.0
    %v989 = vand.u32 %v214, 4294901760
    %v990 = vsub.f32 %v214, %v989
    %v991 = vand.u32 %v990, 4294901760
    %992 = vmatmul.mubr.f32.gmra.mrb[0].mxu0 %v991
    %v993 = vpop.f32.mrb[0].mxu0
    %v994 = vadd.f32 %v806, %v993
    %v995 = vpop.f32.mrb[0].mxu0
    %v996 = vadd.f32 %v808, %v995
    %997 = vmatprep.mubr.f32.mxu0 0.0
    %v998 = vand.u32 %v217, 4294901760
    %v999 = vsub.f32 %v217, %v998
    %v1000 = vand.u32 %v999, 4294901760
    %1001 = vmatmul.mubr.f32.gmra.mrb[0].mxu0 %v1000
    %v1002 = vpop.f32.mrb[0].mxu0
    %v1003 = vadd.f32 %v814, %v1002
    %v1004 = vpop.f32.mrb[0].mxu0
    %v1005 = vadd.f32 %v816, %v1004
    %1006 = vmatprep.mubr.f32.mxu0 0.0
    %v1007 = vand.u32 %v220, 4294901760
    %v1008 = vsub.f32 %v220, %v1007
    %v1009 = vand.u32 %v1008, 4294901760
    %1010 = vmatmul.mubr.f32.gmra.mrb[0].mxu0 %v1009
    %v1011 = vpop.f32.mrb[0].mxu0
    %v1012 = vadd.f32 %v822, %v1011
    %v1013 = vpop.f32.mrb[0].mxu0
    %v1014 = vadd.f32 %v824, %v1013
    %1015 = vdwg.mxu0
    %v1016 = vand.u32 %v175, 4294901760
    %v1017 = vsub.f32 %v175, %v1016
    %v1018 = vand.u32 %v1017, 4294901760
    %1019 = vmatprep.subr.mxu0 %v1018
    %v1020 = vand.u32 %v174, 4294901760
    %v1021 = vsub.f32 %v174, %v1020
    %v1022 = vand.u32 %v1021, 4294901760
    %1023 = vmatpush1.msra.mxu0 %v1022
    %v1024 = vand.u32 %v177, 4294901760
    %v1025 = vsub.f32 %v177, %v1024
    %v1026 = vand.u32 %v1025, 4294901760
    %1027 = vmatprep.subr.mxu0 %v1026
    %v1028 = vand.u32 %v176, 4294901760
    %v1029 = vsub.f32 %v176, %v1028
    %v1030 = vand.u32 %v1029, 4294901760
    %1031 = vmatpush1.msra.mxu0 %v1030
    %v1032 = vand.u32 %v179, 4294901760
    %v1033 = vsub.f32 %v179, %v1032
    %v1034 = vand.u32 %v1033, 4294901760
    %1035 = vmatprep.subr.mxu0 %v1034
    %v1036 = vand.u32 %v178, 4294901760
    %v1037 = vsub.f32 %v178, %v1036
    %v1038 = vand.u32 %v1037, 4294901760
    %1039 = vmatpush1.msra.mxu0 %v1038
    %v1040 = vand.u32 %v227, 4294901760
    %v1041 = vsub.f32 %v227, %v1040
    %v1042 = vand.u32 %v1041, 4294901760
    %1043 = vmatprep.subr.mxu0 %v1042
    %v1044 = vand.u32 %v224, 4294901760
    %v1045 = vsub.f32 %v224, %v1044
    %v1046 = vand.u32 %v1045, 4294901760
    %1047 = vmatpush1.msra.mxu0 %v1046
    %1048 = vmatprep.subr.mxu0 0.0
    %1049 = vmatpush1.msra.mxu0 0.0
    %1050 = vmatprep.subr.mxu0 0.0
    %1051 = vmatpush1.msra.mxu0 0.0
    %1052 = vmatprep.subr.mxu0 0.0
    %1053 = vmatpush1.msra.mxu0 0.0
    %1054 = vmatprep.subr.mxu0 0.0
    %1055 = vmatpush1.msra.mxu0 0.0
    %1056 = vmatprep.subr.mxu0 0.0
    %1057 = vmatpush1.msra.mxu0 0.0
    %1058 = vmatprep.subr.mxu0 0.0
    %1059 = vmatpush1.msra.mxu0 0.0
    %1060 = vmatprep.subr.mxu0 0.0
    %1061 = vmatpush1.msra.mxu0 0.0
    %1062 = vmatprep.subr.mxu0 0.0
    %1063 = vmatpush1.msra.mxu0 0.0
    %1064 = vmatprep.subr.mxu0 0.0
    %1065 = vmatpush1.msra.mxu0 0.0
    %1066 = vmatprep.subr.mxu0 0.0
    %1067 = vmatpush1.msra.mxu0 0.0
    %1068 = vmatprep.subr.mxu0 0.0
    %1069 = vmatpush1.msra.mxu0 0.0
    %1070 = vmatprep.subr.mxu0 0.0
    %1071 = vmatpush1.msra.mxu0 0.0
    %1072 = vmatprep.subr.mxu0 0.0
    %1073 = vmatpush1.msra.mxu0 0.0
    %1074 = vmatprep.subr.mxu0 0.0
    %1075 = vmatpush1.msra.mxu0 0.0
    %1076 = vmatprep.subr.mxu0 0.0
    %1077 = vmatpush1.msra.mxu0 0.0
    %1078 = vmatprep.subr.mxu0 0.0
    %1079 = vmatpush1.msra.mxu0 0.0
    %1080 = vmatprep.subr.mxu0 0.0
    %1081 = vmatpush1.msra.mxu0 0.0
    %1082 = vmatprep.subr.mxu0 0.0
    %1083 = vmatpush1.msra.mxu0 0.0
    %1084 = vmatprep.subr.mxu0 0.0
    %1085 = vmatpush1.msra.mxu0 0.0
    %1086 = vmatprep.subr.mxu0 0.0
    %1087 = vmatpush1.msra.mxu0 0.0
    %1088 = vmatprep.subr.mxu0 0.0
    %1089 = vmatpush1.msra.mxu0 0.0
    %1090 = vmatprep.subr.mxu0 0.0
    %1091 = vmatpush1.msra.mxu0 0.0
    %1092 = vmatprep.subr.mxu0 0.0
    %1093 = vmatpush1.msra.mxu0 0.0
    %1094 = vmatprep.subr.mxu0 0.0
    %1095 = vmatpush1.msra.mxu0 0.0
    %1096 = vmatprep.subr.mxu0 0.0
    %1097 = vmatpush1.msra.mxu0 0.0
    %1098 = vmatprep.subr.mxu0 0.0
    %1099 = vmatpush1.msra.mxu0 0.0
    %1100 = vmatprep.subr.mxu0 0.0
    %1101 = vmatpush1.msra.mxu0 0.0
    %1102 = vmatprep.subr.mxu0 0.0
    %1103 = vmatpush1.msra.mxu0 0.0
    %1104 = vmatprep.mubr.f32.mxu0 0.0
    %v1105 = vand.u32 %v184, 4294901760
    %1106 = vmatmul.mubr.f32.gmra.mrb[0].mxu0 %v1105
    %v1107 = vpop.f32.mrb[0].mxu0
    %v1108 = vadd.f32 %v904, %v1107
    %v1109 = vpop.f32.mrb[0].mxu0
    %v1110 = vadd.f32 %v906, %v1109
    %1111 = vmatprep.mubr.f32.mxu0 0.0
    %v1112 = vand.u32 %v187, 4294901760
    %1113 = vmatmul.mubr.f32.gmra.mrb[0].mxu0 %v1112
    %v1114 = vpop.f32.mrb[0].mxu0
    %v1115 = vadd.f32 %v913, %v1114
    %v1116 = vpop.f32.mrb[0].mxu0
    %v1117 = vadd.f32 %v915, %v1116
    %1118 = vmatprep.mubr.f32.mxu0 0.0
    %v1119 = vand.u32 %v190, 4294901760
    %1120 = vmatmul.mubr.f32.gmra.mrb[0].mxu0 %v1119
    %v1121 = vpop.f32.mrb[0].mxu0
    %v1122 = vadd.f32 %v922, %v1121
    %v1123 = vpop.f32.mrb[0].mxu0
    %v1124 = vadd.f32 %v924, %v1123
    %1125 = vmatprep.mubr.f32.mxu0 0.0
    %v1126 = vand.u32 %v193, 4294901760
    %1127 = vmatmul.mubr.f32.gmra.mrb[0].mxu0 %v1126
    %v1128 = vpop.f32.mrb[0].mxu0
    %v1129 = vadd.f32 %v931, %v1128
    %v1130 = vpop.f32.mrb[0].mxu0
    %v1131 = vadd.f32 %v933, %v1130
    %1132 = vmatprep.mubr.f32.mxu0 0.0
    %v1133 = vand.u32 %v196, 4294901760
    %1134 = vmatmul.mubr.f32.gmra.mrb[0].mxu0 %v1133
    %v1135 = vpop.f32.mrb[0].mxu0
    %v1136 = vadd.f32 %v940, %v1135
    %v1137 = vpop.f32.mrb[0].mxu0
    %v1138 = vadd.f32 %v942, %v1137
    %1139 = vmatprep.mubr.f32.mxu0 0.0
    %v1140 = vand.u32 %v199, 4294901760
    %1141 = vmatmul.mubr.f32.gmra.mrb[0].mxu0 %v1140
    %v1142 = vpop.f32.mrb[0].mxu0
    %v1143 = vadd.f32 %v949, %v1142
    %v1144 = vpop.f32.mrb[0].mxu0
    %v1145 = vadd.f32 %v951, %v1144
    %1146 = vmatprep.mubr.f32.mxu0 0.0
    %v1147 = vand.u32 %v202, 4294901760
    %1148 = vmatmul.mubr.f32.gmra.mrb[0].mxu0 %v1147
    %v1149 = vpop.f32.mrb[0].mxu0
    %v1150 = vadd.f32 %v958, %v1149
    %v1151 = vpop.f32.mrb[0].mxu0
    %v1152 = vadd.f32 %v960, %v1151
    %1153 = vmatprep.mubr.f32.mxu0 0.0
    %v1154 = vand.u32 %v205, 4294901760
    %1155 = vmatmul.mubr.f32.gmra.mrb[0].mxu0 %v1154
    %v1156 = vpop.f32.mrb[0].mxu0
    %v1157 = vadd.f32 %v967, %v1156
    %v1158 = vpop.f32.mrb[0].mxu0
    %v1159 = vadd.f32 %v969, %v1158
    %1160 = vmatprep.mubr.f32.mxu0 0.0
    %v1161 = vand.u32 %v208, 4294901760
    %1162 = vmatmul.mubr.f32.gmra.mrb[0].mxu0 %v1161
    %v1163 = vpop.f32.mrb[0].mxu0
    %v1164 = vadd.f32 %v976, %v1163
    %v1165 = vpop.f32.mrb[0].mxu0
    %v1166 = vadd.f32 %v978, %v1165
    %1167 = vmatprep.mubr.f32.mxu0 0.0
    %v1168 = vand.u32 %v211, 4294901760
    %1169 = vmatmul.mubr.f32.gmra.mrb[0].mxu0 %v1168
    %v1170 = vpop.f32.mrb[0].mxu0
    %v1171 = vadd.f32 %v985, %v1170
    %v1172 = vpop.f32.mrb[0].mxu0
    %v1173 = vadd.f32 %v987, %v1172
    %1174 = vmatprep.mubr.f32.mxu0 0.0
    %v1175 = vand.u32 %v214, 4294901760
    %1176 = vmatmul.mubr.f32.gmra.mrb[0].mxu0 %v1175
    %v1177 = vpop.f32.mrb[0].mxu0
    %v1178 = vadd.f32 %v994, %v1177
    %v1179 = vpop.f32.mrb[0].mxu0
    %v1180 = vadd.f32 %v996, %v1179
    %1181 = vmatprep.mubr.f32.mxu0 0.0
    %v1182 = vand.u32 %v217, 4294901760
    %1183 = vmatmul.mubr.f32.gmra.mrb[0].mxu0 %v1182
    %v1184 = vpop.f32.mrb[0].mxu0
    %v1185 = vadd.f32 %v1003, %v1184
    %v1186 = vpop.f32.mrb[0].mxu0
    %v1187 = vadd.f32 %v1005, %v1186
    %1188 = vmatprep.mubr.f32.mxu0 0.0
    %v1189 = vand.u32 %v220, 4294901760
    %1190 = vmatmul.mubr.f32.gmra.mrb[0].mxu0 %v1189
    %v1191 = vpop.f32.mrb[0].mxu0
    %v1192 = vadd.f32 %v1012, %v1191
    %v1193 = vpop.f32.mrb[0].mxu0
    %v1194 = vadd.f32 %v1014, %v1193
    %1195 = vdwg.mxu0
    %v1196 = vand.u32 %v175, 4294901760
    %1197 = vmatprep.subr.mxu0 %v1196
    %v1198 = vand.u32 %v174, 4294901760
    %1199 = vmatpush1.msra.mxu0 %v1198
    %v1200 = vand.u32 %v177, 4294901760
    %1201 = vmatprep.subr.mxu0 %v1200
    %v1202 = vand.u32 %v176, 4294901760
    %1203 = vmatpush1.msra.mxu0 %v1202
    %v1204 = vand.u32 %v179, 4294901760
    %1205 = vmatprep.subr.mxu0 %v1204
    %v1206 = vand.u32 %v178, 4294901760
    %1207 = vmatpush1.msra.mxu0 %v1206
    %v1208 = vand.u32 %v227, 4294901760
    %1209 = vmatprep.subr.mxu0 %v1208
    %v1210 = vand.u32 %v224, 4294901760
    %1211 = vmatpush1.msra.mxu0 %v1210
    %1212 = vmatprep.subr.mxu0 0.0
    %1213 = vmatpush1.msra.mxu0 0.0
    %1214 = vmatprep.subr.mxu0 0.0
    %1215 = vmatpush1.msra.mxu0 0.0
    %1216 = vmatprep.subr.mxu0 0.0
    %1217 = vmatpush1.msra.mxu0 0.0
    %1218 = vmatprep.subr.mxu0 0.0
    %1219 = vmatpush1.msra.mxu0 0.0
    %1220 = vmatprep.subr.mxu0 0.0
    %1221 = vmatpush1.msra.mxu0 0.0
    %1222 = vmatprep.subr.mxu0 0.0
    %1223 = vmatpush1.msra.mxu0 0.0
    %1224 = vmatprep.subr.mxu0 0.0
    %1225 = vmatpush1.msra.mxu0 0.0
    %1226 = vmatprep.subr.mxu0 0.0
    %1227 = vmatpush1.msra.mxu0 0.0
    %1228 = vmatprep.subr.mxu0 0.0
    %1229 = vmatpush1.msra.mxu0 0.0
    %1230 = vmatprep.subr.mxu0 0.0
    %1231 = vmatpush1.msra.mxu0 0.0
    %1232 = vmatprep.subr.mxu0 0.0
    %1233 = vmatpush1.msra.mxu0 0.0
    %1234 = vmatprep.subr.mxu0 0.0
    %1235 = vmatpush1.msra.mxu0 0.0
    %1236 = vmatprep.subr.mxu0 0.0
    %1237 = vmatpush1.msra.mxu0 0.0
    %1238 = vmatprep.subr.mxu0 0.0
    %1239 = vmatpush1.msra.mxu0 0.0
    %1240 = vmatprep.subr.mxu0 0.0
    %1241 = vmatpush1.msra.mxu0 0.0
    %1242 = vmatprep.subr.mxu0 0.0
    %1243 = vmatpush1.msra.mxu0 0.0
    %1244 = vmatprep.subr.mxu0 0.0
    %1245 = vmatpush1.msra.mxu0 0.0
    %1246 = vmatprep.subr.mxu0 0.0
    %1247 = vmatpush1.msra.mxu0 0.0
    %1248 = vmatprep.subr.mxu0 0.0
    %1249 = vmatpush1.msra.mxu0 0.0
    %1250 = vmatprep.subr.mxu0 0.0
    %1251 = vmatpush1.msra.mxu0 0.0
    %1252 = vmatprep.subr.mxu0 0.0
    %1253 = vmatpush1.msra.mxu0 0.0
    %1254 = vmatprep.subr.mxu0 0.0
    %1255 = vmatpush1.msra.mxu0 0.0
    %1256 = vmatprep.subr.mxu0 0.0
    %1257 = vmatpush1.msra.mxu0 0.0
    %1258 = vmatprep.subr.mxu0 0.0
    %1259 = vmatpush1.msra.mxu0 0.0
    %1260 = vmatprep.subr.mxu0 0.0
    %1261 = vmatpush1.msra.mxu0 0.0
    %1262 = vmatprep.subr.mxu0 0.0
    %1263 = vmatpush1.msra.mxu0 0.0
    %1264 = vmatprep.subr.mxu0 0.0
    %1265 = vmatpush1.msra.mxu0 0.0
    %1266 = vmatprep.subr.mxu0 0.0
    %1267 = vmatpush1.msra.mxu0 0.0
    %1268 = vmatprep.mubr.f32.mxu0 0.0
    %v1269 = vand.u32 %v184, 4294901760
    %1270 = vmatmul.mubr.f32.gmra.mrb[0].mxu0 %v1269
    %v1271 = vpop.f32.mrb[0].mxu0
    %v1272 = vadd.f32 %v1108, %v1271
    %v1273 = vpop.f32.mrb[0].mxu0
    %v1274 = vadd.f32 %v1110, %v1273
    %1275 = vmatprep.mubr.f32.mxu0 0.0
    %v1276 = vand.u32 %v187, 4294901760
    %1277 = vmatmul.mubr.f32.gmra.mrb[0].mxu0 %v1276
    %v1278 = vpop.f32.mrb[0].mxu0
    %v1279 = vadd.f32 %v1115, %v1278
    %v1280 = vpop.f32.mrb[0].mxu0
    %v1281 = vadd.f32 %v1117, %v1280
    %1282 = vmatprep.mubr.f32.mxu0 0.0
    %v1283 = vand.u32 %v190, 4294901760
    %1284 = vmatmul.mubr.f32.gmra.mrb[0].mxu0 %v1283
    %v1285 = vpop.f32.mrb[0].mxu0
    %v1286 = vadd.f32 %v1122, %v1285
    %v1287 = vpop.f32.mrb[0].mxu0
    %v1288 = vadd.f32 %v1124, %v1287
    %1289 = vmatprep.mubr.f32.mxu0 0.0
    %v1290 = vand.u32 %v193, 4294901760
    %1291 = vmatmul.mubr.f32.gmra.mrb[0].mxu0 %v1290
    %v1292 = vpop.f32.mrb[0].mxu0
    %v1293 = vadd.f32 %v1129, %v1292
    %v1294 = vpop.f32.mrb[0].mxu0
    %v1295 = vadd.f32 %v1131, %v1294
    %1296 = vmatprep.mubr.f32.mxu0 0.0
    %v1297 = vand.u32 %v196, 4294901760
    %1298 = vmatmul.mubr.f32.gmra.mrb[0].mxu0 %v1297
    %v1299 = vpop.f32.mrb[0].mxu0
    %v1300 = vadd.f32 %v1136, %v1299
    %v1301 = vpop.f32.mrb[0].mxu0
    %v1302 = vadd.f32 %v1138, %v1301
    %1303 = vmatprep.mubr.f32.mxu0 0.0
    %v1304 = vand.u32 %v199, 4294901760
    %1305 = vmatmul.mubr.f32.gmra.mrb[0].mxu0 %v1304
    %v1306 = vpop.f32.mrb[0].mxu0
    %v1307 = vadd.f32 %v1143, %v1306
    %v1308 = vpop.f32.mrb[0].mxu0
    %v1309 = vadd.f32 %v1145, %v1308
    %1310 = vmatprep.mubr.f32.mxu0 0.0
    %v1311 = vand.u32 %v202, 4294901760
    %1312 = vmatmul.mubr.f32.gmra.mrb[0].mxu0 %v1311
    %v1313 = vpop.f32.mrb[0].mxu0
    %v1314 = vadd.f32 %v1150, %v1313
    %v1315 = vpop.f32.mrb[0].mxu0
    %v1316 = vadd.f32 %v1152, %v1315
    %1317 = vmatprep.mubr.f32.mxu0 0.0
    %v1318 = vand.u32 %v205, 4294901760
    %1319 = vmatmul.mubr.f32.gmra.mrb[0].mxu0 %v1318
    %v1320 = vpop.f32.mrb[0].mxu0
    %v1321 = vadd.f32 %v1157, %v1320
    %v1322 = vpop.f32.mrb[0].mxu0
    %v1323 = vadd.f32 %v1159, %v1322
    %1324 = vmatprep.mubr.f32.mxu0 0.0
    %v1325 = vand.u32 %v208, 4294901760
    %1326 = vmatmul.mubr.f32.gmra.mrb[0].mxu0 %v1325
    %v1327 = vpop.f32.mrb[0].mxu0
    %v1328 = vadd.f32 %v1164, %v1327
    %v1329 = vpop.f32.mrb[0].mxu0
    %v1330 = vadd.f32 %v1166, %v1329
    %1331 = vmatprep.mubr.f32.mxu0 0.0
    %v1332 = vand.u32 %v211, 4294901760
    %1333 = vmatmul.mubr.f32.gmra.mrb[0].mxu0 %v1332
    %v1334 = vpop.f32.mrb[0].mxu0
    %v1335 = vadd.f32 %v1171, %v1334
    %v1336 = vpop.f32.mrb[0].mxu0
    %v1337 = vadd.f32 %v1173, %v1336
    %1338 = vmatprep.mubr.f32.mxu0 0.0
    %v1339 = vand.u32 %v214, 4294901760
    %1340 = vmatmul.mubr.f32.gmra.mrb[0].mxu0 %v1339
    %v1341 = vpop.f32.mrb[0].mxu0
    %v1342 = vadd.f32 %v1178, %v1341
    %v1343 = vpop.f32.mrb[0].mxu0
    %v1344 = vadd.f32 %v1180, %v1343
    %1345 = vmatprep.mubr.f32.mxu0 0.0
    %v1346 = vand.u32 %v217, 4294901760
    %1347 = vmatmul.mubr.f32.gmra.mrb[0].mxu0 %v1346
    %v1348 = vpop.f32.mrb[0].mxu0
    %v1349 = vadd.f32 %v1185, %v1348
    %v1350 = vpop.f32.mrb[0].mxu0
    %v1351 = vadd.f32 %v1187, %v1350
    %1352 = vmatprep.mubr.f32.mxu0 0.0
    %v1353 = vand.u32 %v220, 4294901760
    %1354 = vmatmul.mubr.f32.gmra.mrb[0].mxu0 %v1353
    %v1355 = vpop.f32.mrb[0].mxu0
    %v1356 = vadd.f32 %v1192, %v1355
    %v1357 = vpop.f32.mrb[0].mxu0
    %v1358 = vadd.f32 %v1194, %v1357
    %1359 = vdwg.mxu0
    %v1360 = vmax.f32 %v1272, 0.0
    %v1361 = vmax.f32 %v1274, 0.0
    %v1362 = vmax.f32 %v1279, 0.0
    %v1363 = vmax.f32 %v1281, 0.0
    %v1364 = vmax.f32 %v1286, 0.0
    %v1365 = vmax.f32 %v1288, 0.0
    %v1366 = vmax.f32 %v1293, 0.0
    %v1367 = vmax.f32 %v1295, 0.0
    %v1368 = vmax.f32 %v1300, 0.0
    %v1369 = vmax.f32 %v1302, 0.0
    %v1370 = vmax.f32 %v1307, 0.0
    %v1371 = vmax.f32 %v1309, 0.0
    %v1372 = vmax.f32 %v1314, 0.0
    %v1373 = vmax.f32 %v1316, 0.0
    %v1374 = vmax.f32 %v1321, 0.0
    %v1375 = vmax.f32 %v1323, 0.0
    %v1376 = vmax.f32 %v1328, 0.0
    %v1377 = vmax.f32 %v1330, 0.0
    %v1378 = vmax.f32 %v1335, 0.0
    %v1379 = vmax.f32 %v1337, 0.0
    %v1380 = vmax.f32 %v1342, 0.0
    %v1381 = vmax.f32 %v1344, 0.0
    %v1382 = vmax.f32 %v1349, 0.0
    %v1383 = vmax.f32 %v1351, 0.0
    %v1384 = vmax.f32 %v1356, 0.0
    %v1385 = vmax.f32 %v1358, 0.0
    %vm1386 = vcmask 818176
    %v1388 = vsel %vm1386, %v40, 0
    %v1391 = vsel %vm1386, %v41, 0
    %v1394 = vsel %vm1386, %v42, 0
    %v1397 = vsel %vm1386, %v43, 0
    %v1400 = vsel %vm1386, %v44, 0
    %v1403 = vsel %vm1386, %v45, 0
    %v1406 = vsel %vm1386, %v46, 0
    %vm1408 = vcmask 1043456
    %v1410 = vsel %vm1408, %v1384, 0
    %v1413 = vsel %vm1408, %v1385, 0
    %v1415 = vand.u32 %v1361, 4294901760
    %1416 = vmatprep.subr.mxu0 %v1415
    %v1417 = vand.u32 %v1360, 4294901760
    %1418 = vmatpush1.msra.mxu0 %v1417
    %v1419 = vand.u32 %v1363, 4294901760
    %1420 = vmatprep.subr.mxu0 %v1419
    %v1421 = vand.u32 %v1362, 4294901760
    %1422 = vmatpush1.msra.mxu0 %v1421
    %v1423 = vand.u32 %v1365, 4294901760
    %1424 = vmatprep.subr.mxu0 %v1423
    %v1425 = vand.u32 %v1364, 4294901760
    %1426 = vmatpush1.msra.mxu0 %v1425
    %v1427 = vand.u32 %v1367, 4294901760
    %1428 = vmatprep.subr.mxu0 %v1427
    %v1429 = vand.u32 %v1366, 4294901760
    %1430 = vmatpush1.msra.mxu0 %v1429
    %v1431 = vand.u32 %v1369, 4294901760
    %1432 = vmatprep.subr.mxu0 %v1431
    %v1433 = vand.u32 %v1368, 4294901760
    %1434 = vmatpush1.msra.mxu0 %v1433
    %v1435 = vand.u32 %v1371, 4294901760
    %1436 = vmatprep.subr.mxu0 %v1435
    %v1437 = vand.u32 %v1370, 4294901760
    %1438 = vmatpush1.msra.mxu0 %v1437
    %v1439 = vand.u32 %v1373, 4294901760
    %1440 = vmatprep.subr.mxu0 %v1439
    %v1441 = vand.u32 %v1372, 4294901760
    %1442 = vmatpush1.msra.mxu0 %v1441
    %v1443 = vand.u32 %v1375, 4294901760
    %1444 = vmatprep.subr.mxu0 %v1443
    %v1445 = vand.u32 %v1374, 4294901760
    %1446 = vmatpush1.msra.mxu0 %v1445
    %v1447 = vand.u32 %v1377, 4294901760
    %1448 = vmatprep.subr.mxu0 %v1447
    %v1449 = vand.u32 %v1376, 4294901760
    %1450 = vmatpush1.msra.mxu0 %v1449
    %v1451 = vand.u32 %v1379, 4294901760
    %1452 = vmatprep.subr.mxu0 %v1451
    %v1453 = vand.u32 %v1378, 4294901760
    %1454 = vmatpush1.msra.mxu0 %v1453
    %v1455 = vand.u32 %v1381, 4294901760
    %1456 = vmatprep.subr.mxu0 %v1455
    %v1457 = vand.u32 %v1380, 4294901760
    %1458 = vmatpush1.msra.mxu0 %v1457
    %v1459 = vand.u32 %v1383, 4294901760
    %1460 = vmatprep.subr.mxu0 %v1459
    %v1461 = vand.u32 %v1382, 4294901760
    %1462 = vmatpush1.msra.mxu0 %v1461
    %v1463 = vand.u32 %v1413, 4294901760
    %1464 = vmatprep.subr.mxu0 %v1463
    %v1465 = vand.u32 %v1410, 4294901760
    %1466 = vmatpush1.msra.mxu0 %v1465
    %1467 = vmatprep.subr.mxu0 0.0
    %1468 = vmatpush1.msra.mxu0 0.0
    %1469 = vmatprep.subr.mxu0 0.0
    %1470 = vmatpush1.msra.mxu0 0.0
    %1471 = vmatprep.subr.mxu0 0.0
    %1472 = vmatpush1.msra.mxu0 0.0
    %1473 = vmatprep.subr.mxu0 0.0
    %1474 = vmatpush1.msra.mxu0 0.0
    %1475 = vmatprep.subr.mxu0 0.0
    %1476 = vmatpush1.msra.mxu0 0.0
    %1477 = vmatprep.subr.mxu0 0.0
    %1478 = vmatpush1.msra.mxu0 0.0
    %1479 = vmatprep.subr.mxu0 0.0
    %1480 = vmatpush1.msra.mxu0 0.0
    %1481 = vmatprep.subr.mxu0 0.0
    %1482 = vmatpush1.msra.mxu0 0.0
    %1483 = vmatprep.subr.mxu0 0.0
    %1484 = vmatpush1.msra.mxu0 0.0
    %1485 = vmatprep.subr.mxu0 0.0
    %1486 = vmatpush1.msra.mxu0 0.0
    %1487 = vmatprep.subr.mxu0 0.0
    %1488 = vmatpush1.msra.mxu0 0.0
    %1489 = vmatprep.subr.mxu0 0.0
    %1490 = vmatpush1.msra.mxu0 0.0
    %1491 = vmatprep.subr.mxu0 0.0
    %1492 = vmatpush1.msra.mxu0 0.0
    %1493 = vmatprep.subr.mxu0 0.0
    %1494 = vmatpush1.msra.mxu0 0.0
    %1495 = vmatprep.subr.mxu0 0.0
    %1496 = vmatpush1.msra.mxu0 0.0
    %1497 = vmatprep.subr.mxu0 0.0
    %1498 = vmatpush1.msra.mxu0 0.0
    %1499 = vmatprep.subr.mxu0 0.0
    %1500 = vmatpush1.msra.mxu0 0.0
    %1501 = vmatprep.subr.mxu0 0.0
    %1502 = vmatpush1.msra.mxu0 0.0
    %1503 = vmatprep.subr.mxu0 0.0
    %1504 = vmatpush1.msra.mxu0 0.0
    %1505 = vmatprep.mubr.f32.mxu0 0.0
    %v1506 = vand.u32 %v1388, 4294901760
    %v1507 = vsub.f32 %v1388, %v1506
    %v1508 = vand.u32 %v1507, 4294901760
    %v1509 = vsub.f32 %v1507, %v1508
    %v1510 = vand.u32 %v1509, 4294901760
    %1511 = vmatmul.mubr.f32.gmra.mrb[0].mxu0 %v1510
    %v1512 = vpop.f32.mrb[0].mxu0
    %v1513 = vadd.f32 %v136, %v1512
    %v1514 = vpop.f32.mrb[0].mxu0
    %v1515 = vadd.f32 %v136, %v1514
    %1516 = vmatprep.mubr.f32.mxu0 0.0
    %v1517 = vand.u32 %v1391, 4294901760
    %v1518 = vsub.f32 %v1391, %v1517
    %v1519 = vand.u32 %v1518, 4294901760
    %v1520 = vsub.f32 %v1518, %v1519
    %v1521 = vand.u32 %v1520, 4294901760
    %1522 = vmatmul.mubr.f32.gmra.mrb[0].mxu0 %v1521
    %v1523 = vpop.f32.mrb[0].mxu0
    %v1524 = vadd.f32 %v141, %v1523
    %v1525 = vpop.f32.mrb[0].mxu0
    %v1526 = vadd.f32 %v141, %v1525
    %1527 = vmatprep.mubr.f32.mxu0 0.0
    %v1528 = vand.u32 %v1394, 4294901760
    %v1529 = vsub.f32 %v1394, %v1528
    %v1530 = vand.u32 %v1529, 4294901760
    %v1531 = vsub.f32 %v1529, %v1530
    %v1532 = vand.u32 %v1531, 4294901760
    %1533 = vmatmul.mubr.f32.gmra.mrb[0].mxu0 %v1532
    %v1534 = vpop.f32.mrb[0].mxu0
    %v1535 = vadd.f32 %v146, %v1534
    %v1536 = vpop.f32.mrb[0].mxu0
    %v1537 = vadd.f32 %v146, %v1536
    %1538 = vmatprep.mubr.f32.mxu0 0.0
    %v1539 = vand.u32 %v1397, 4294901760
    %v1540 = vsub.f32 %v1397, %v1539
    %v1541 = vand.u32 %v1540, 4294901760
    %v1542 = vsub.f32 %v1540, %v1541
    %v1543 = vand.u32 %v1542, 4294901760
    %1544 = vmatmul.mubr.f32.gmra.mrb[0].mxu0 %v1543
    %v1545 = vpop.f32.mrb[0].mxu0
    %v1546 = vadd.f32 %v151, %v1545
    %v1547 = vpop.f32.mrb[0].mxu0
    %v1548 = vadd.f32 %v151, %v1547
    %1549 = vmatprep.mubr.f32.mxu0 0.0
    %v1550 = vand.u32 %v1400, 4294901760
    %v1551 = vsub.f32 %v1400, %v1550
    %v1552 = vand.u32 %v1551, 4294901760
    %v1553 = vsub.f32 %v1551, %v1552
    %v1554 = vand.u32 %v1553, 4294901760
    %1555 = vmatmul.mubr.f32.gmra.mrb[0].mxu0 %v1554
    %v1556 = vpop.f32.mrb[0].mxu0
    %v1557 = vadd.f32 %v156, %v1556
    %v1558 = vpop.f32.mrb[0].mxu0
    %v1559 = vadd.f32 %v156, %v1558
    %1560 = vmatprep.mubr.f32.mxu0 0.0
    %v1561 = vand.u32 %v1403, 4294901760
    %v1562 = vsub.f32 %v1403, %v1561
    %v1563 = vand.u32 %v1562, 4294901760
    %v1564 = vsub.f32 %v1562, %v1563
    %v1565 = vand.u32 %v1564, 4294901760
    %1566 = vmatmul.mubr.f32.gmra.mrb[0].mxu0 %v1565
    %v1567 = vpop.f32.mrb[0].mxu0
    %v1568 = vadd.f32 %v161, %v1567
    %v1569 = vpop.f32.mrb[0].mxu0
    %v1570 = vadd.f32 %v161, %v1569
    %1571 = vmatprep.mubr.f32.mxu0 0.0
    %v1572 = vand.u32 %v1406, 4294901760
    %v1573 = vsub.f32 %v1406, %v1572
    %v1574 = vand.u32 %v1573, 4294901760
    %v1575 = vsub.f32 %v1573, %v1574
    %v1576 = vand.u32 %v1575, 4294901760
    %1577 = vmatmul.mubr.f32.gmra.mrb[0].mxu0 %v1576
    %v1578 = vpop.f32.mrb[0].mxu0
    %v1579 = vadd.f32 %v166, %v1578
    %v1580 = vpop.f32.mrb[0].mxu0
    %v1581 = vadd.f32 %v166, %v1580
    %1582 = vdwg.mxu0
    %v1583 = vand.u32 %v1361, 4294901760
    %v1584 = vsub.f32 %v1361, %v1583
    %v1585 = vand.u32 %v1584, 4294901760
    %v1586 = vsub.f32 %v1584, %v1585
    %v1587 = vand.u32 %v1586, 4294901760
    %1588 = vmatprep.subr.mxu0 %v1587
    %v1589 = vand.u32 %v1360, 4294901760
    %v1590 = vsub.f32 %v1360, %v1589
    %v1591 = vand.u32 %v1590, 4294901760
    %v1592 = vsub.f32 %v1590, %v1591
    %v1593 = vand.u32 %v1592, 4294901760
    %1594 = vmatpush1.msra.mxu0 %v1593
    %v1595 = vand.u32 %v1363, 4294901760
    %v1596 = vsub.f32 %v1363, %v1595
    %v1597 = vand.u32 %v1596, 4294901760
    %v1598 = vsub.f32 %v1596, %v1597
    %v1599 = vand.u32 %v1598, 4294901760
    %1600 = vmatprep.subr.mxu0 %v1599
    %v1601 = vand.u32 %v1362, 4294901760
    %v1602 = vsub.f32 %v1362, %v1601
    %v1603 = vand.u32 %v1602, 4294901760
    %v1604 = vsub.f32 %v1602, %v1603
    %v1605 = vand.u32 %v1604, 4294901760
    %1606 = vmatpush1.msra.mxu0 %v1605
    %v1607 = vand.u32 %v1365, 4294901760
    %v1608 = vsub.f32 %v1365, %v1607
    %v1609 = vand.u32 %v1608, 4294901760
    %v1610 = vsub.f32 %v1608, %v1609
    %v1611 = vand.u32 %v1610, 4294901760
    %1612 = vmatprep.subr.mxu0 %v1611
    %v1613 = vand.u32 %v1364, 4294901760
    %v1614 = vsub.f32 %v1364, %v1613
    %v1615 = vand.u32 %v1614, 4294901760
    %v1616 = vsub.f32 %v1614, %v1615
    %v1617 = vand.u32 %v1616, 4294901760
    %1618 = vmatpush1.msra.mxu0 %v1617
    %v1619 = vand.u32 %v1367, 4294901760
    %v1620 = vsub.f32 %v1367, %v1619
    %v1621 = vand.u32 %v1620, 4294901760
    %v1622 = vsub.f32 %v1620, %v1621
    %v1623 = vand.u32 %v1622, 4294901760
    %1624 = vmatprep.subr.mxu0 %v1623
    %v1625 = vand.u32 %v1366, 4294901760
    %v1626 = vsub.f32 %v1366, %v1625
    %v1627 = vand.u32 %v1626, 4294901760
    %v1628 = vsub.f32 %v1626, %v1627
    %v1629 = vand.u32 %v1628, 4294901760
    %1630 = vmatpush1.msra.mxu0 %v1629
    %v1631 = vand.u32 %v1369, 4294901760
    %v1632 = vsub.f32 %v1369, %v1631
    %v1633 = vand.u32 %v1632, 4294901760
    %v1634 = vsub.f32 %v1632, %v1633
    %v1635 = vand.u32 %v1634, 4294901760
    %1636 = vmatprep.subr.mxu0 %v1635
    %v1637 = vand.u32 %v1368, 4294901760
    %v1638 = vsub.f32 %v1368, %v1637
    %v1639 = vand.u32 %v1638, 4294901760
    %v1640 = vsub.f32 %v1638, %v1639
    %v1641 = vand.u32 %v1640, 4294901760
    %1642 = vmatpush1.msra.mxu0 %v1641
    %v1643 = vand.u32 %v1371, 4294901760
    %v1644 = vsub.f32 %v1371, %v1643
    %v1645 = vand.u32 %v1644, 4294901760
    %v1646 = vsub.f32 %v1644, %v1645
    %v1647 = vand.u32 %v1646, 4294901760
    %1648 = vmatprep.subr.mxu0 %v1647
    %v1649 = vand.u32 %v1370, 4294901760
    %v1650 = vsub.f32 %v1370, %v1649
    %v1651 = vand.u32 %v1650, 4294901760
    %v1652 = vsub.f32 %v1650, %v1651
    %v1653 = vand.u32 %v1652, 4294901760
    %1654 = vmatpush1.msra.mxu0 %v1653
    %v1655 = vand.u32 %v1373, 4294901760
    %v1656 = vsub.f32 %v1373, %v1655
    %v1657 = vand.u32 %v1656, 4294901760
    %v1658 = vsub.f32 %v1656, %v1657
    %v1659 = vand.u32 %v1658, 4294901760
    %1660 = vmatprep.subr.mxu0 %v1659
    %v1661 = vand.u32 %v1372, 4294901760
    %v1662 = vsub.f32 %v1372, %v1661
    %v1663 = vand.u32 %v1662, 4294901760
    %v1664 = vsub.f32 %v1662, %v1663
    %v1665 = vand.u32 %v1664, 4294901760
    %1666 = vmatpush1.msra.mxu0 %v1665
    %v1667 = vand.u32 %v1375, 4294901760
    %v1668 = vsub.f32 %v1375, %v1667
    %v1669 = vand.u32 %v1668, 4294901760
    %v1670 = vsub.f32 %v1668, %v1669
    %v1671 = vand.u32 %v1670, 4294901760
    %1672 = vmatprep.subr.mxu0 %v1671
    %v1673 = vand.u32 %v1374, 4294901760
    %v1674 = vsub.f32 %v1374, %v1673
    %v1675 = vand.u32 %v1674, 4294901760
    %v1676 = vsub.f32 %v1674, %v1675
    %v1677 = vand.u32 %v1676, 4294901760
    %1678 = vmatpush1.msra.mxu0 %v1677
    %v1679 = vand.u32 %v1377, 4294901760
    %v1680 = vsub.f32 %v1377, %v1679
    %v1681 = vand.u32 %v1680, 4294901760
    %v1682 = vsub.f32 %v1680, %v1681
    %v1683 = vand.u32 %v1682, 4294901760
    %1684 = vmatprep.subr.mxu0 %v1683
    %v1685 = vand.u32 %v1376, 4294901760
    %v1686 = vsub.f32 %v1376, %v1685
    %v1687 = vand.u32 %v1686, 4294901760
    %v1688 = vsub.f32 %v1686, %v1687
    %v1689 = vand.u32 %v1688, 4294901760
    %1690 = vmatpush1.msra.mxu0 %v1689
    %v1691 = vand.u32 %v1379, 4294901760
    %v1692 = vsub.f32 %v1379, %v1691
    %v1693 = vand.u32 %v1692, 4294901760
    %v1694 = vsub.f32 %v1692, %v1693
    %v1695 = vand.u32 %v1694, 4294901760
    %1696 = vmatprep.subr.mxu0 %v1695
    %v1697 = vand.u32 %v1378, 4294901760
    %v1698 = vsub.f32 %v1378, %v1697
    %v1699 = vand.u32 %v1698, 4294901760
    %v1700 = vsub.f32 %v1698, %v1699
    %v1701 = vand.u32 %v1700, 4294901760
    %1702 = vmatpush1.msra.mxu0 %v1701
    %v1703 = vand.u32 %v1381, 4294901760
    %v1704 = vsub.f32 %v1381, %v1703
    %v1705 = vand.u32 %v1704, 4294901760
    %v1706 = vsub.f32 %v1704, %v1705
    %v1707 = vand.u32 %v1706, 4294901760
    %1708 = vmatprep.subr.mxu0 %v1707
    %v1709 = vand.u32 %v1380, 4294901760
    %v1710 = vsub.f32 %v1380, %v1709
    %v1711 = vand.u32 %v1710, 4294901760
    %v1712 = vsub.f32 %v1710, %v1711
    %v1713 = vand.u32 %v1712, 4294901760
    %1714 = vmatpush1.msra.mxu0 %v1713
    %v1715 = vand.u32 %v1383, 4294901760
    %v1716 = vsub.f32 %v1383, %v1715
    %v1717 = vand.u32 %v1716, 4294901760
    %v1718 = vsub.f32 %v1716, %v1717
    %v1719 = vand.u32 %v1718, 4294901760
    %1720 = vmatprep.subr.mxu0 %v1719
    %v1721 = vand.u32 %v1382, 4294901760
    %v1722 = vsub.f32 %v1382, %v1721
    %v1723 = vand.u32 %v1722, 4294901760
    %v1724 = vsub.f32 %v1722, %v1723
    %v1725 = vand.u32 %v1724, 4294901760
    %1726 = vmatpush1.msra.mxu0 %v1725
    %v1727 = vand.u32 %v1413, 4294901760
    %v1728 = vsub.f32 %v1413, %v1727
    %v1729 = vand.u32 %v1728, 4294901760
    %v1730 = vsub.f32 %v1728, %v1729
    %v1731 = vand.u32 %v1730, 4294901760
    %1732 = vmatprep.subr.mxu0 %v1731
    %v1733 = vand.u32 %v1410, 4294901760
    %v1734 = vsub.f32 %v1410, %v1733
    %v1735 = vand.u32 %v1734, 4294901760
    %v1736 = vsub.f32 %v1734, %v1735
    %v1737 = vand.u32 %v1736, 4294901760
    %1738 = vmatpush1.msra.mxu0 %v1737
    %1739 = vmatprep.subr.mxu0 0.0
    %1740 = vmatpush1.msra.mxu0 0.0
    %1741 = vmatprep.subr.mxu0 0.0
    %1742 = vmatpush1.msra.mxu0 0.0
    %1743 = vmatprep.subr.mxu0 0.0
    %1744 = vmatpush1.msra.mxu0 0.0
    %1745 = vmatprep.subr.mxu0 0.0
    %1746 = vmatpush1.msra.mxu0 0.0
    %1747 = vmatprep.subr.mxu0 0.0
    %1748 = vmatpush1.msra.mxu0 0.0
    %1749 = vmatprep.subr.mxu0 0.0
    %1750 = vmatpush1.msra.mxu0 0.0
    %1751 = vmatprep.subr.mxu0 0.0
    %1752 = vmatpush1.msra.mxu0 0.0
    %1753 = vmatprep.subr.mxu0 0.0
    %1754 = vmatpush1.msra.mxu0 0.0
    %1755 = vmatprep.subr.mxu0 0.0
    %1756 = vmatpush1.msra.mxu0 0.0
    %1757 = vmatprep.subr.mxu0 0.0
    %1758 = vmatpush1.msra.mxu0 0.0
    %1759 = vmatprep.subr.mxu0 0.0
    %1760 = vmatpush1.msra.mxu0 0.0
    %1761 = vmatprep.subr.mxu0 0.0
    %1762 = vmatpush1.msra.mxu0 0.0
    %1763 = vmatprep.subr.mxu0 0.0
    %1764 = vmatpush1.msra.mxu0 0.0
    %1765 = vmatprep.subr.mxu0 0.0
    %1766 = vmatpush1.msra.mxu0 0.0
    %1767 = vmatprep.subr.mxu0 0.0
    %1768 = vmatpush1.msra.mxu0 0.0
    %1769 = vmatprep.subr.mxu0 0.0
    %1770 = vmatpush1.msra.mxu0 0.0
    %1771 = vmatprep.subr.mxu0 0.0
    %1772 = vmatpush1.msra.mxu0 0.0
    %1773 = vmatprep.subr.mxu0 0.0
    %1774 = vmatpush1.msra.mxu0 0.0
    %1775 = vmatprep.subr.mxu0 0.0
    %1776 = vmatpush1.msra.mxu0 0.0
    %1777 = vmatprep.mubr.f32.mxu0 0.0
    %v1778 = vand.u32 %v1388, 4294901760
    %1779 = vmatmul.mubr.f32.gmra.mrb[0].mxu0 %v1778
    %v1780 = vpop.f32.mrb[0].mxu0
    %v1781 = vadd.f32 %v1513, %v1780
    %v1782 = vpop.f32.mrb[0].mxu0
    %v1783 = vadd.f32 %v1515, %v1782
    %1784 = vmatprep.mubr.f32.mxu0 0.0
    %v1785 = vand.u32 %v1391, 4294901760
    %1786 = vmatmul.mubr.f32.gmra.mrb[0].mxu0 %v1785
    %v1787 = vpop.f32.mrb[0].mxu0
    %v1788 = vadd.f32 %v1524, %v1787
    %v1789 = vpop.f32.mrb[0].mxu0
    %v1790 = vadd.f32 %v1526, %v1789
    %1791 = vmatprep.mubr.f32.mxu0 0.0
    %v1792 = vand.u32 %v1394, 4294901760
    %1793 = vmatmul.mubr.f32.gmra.mrb[0].mxu0 %v1792
    %v1794 = vpop.f32.mrb[0].mxu0
    %v1795 = vadd.f32 %v1535, %v1794
    %v1796 = vpop.f32.mrb[0].mxu0
    %v1797 = vadd.f32 %v1537, %v1796
    %1798 = vmatprep.mubr.f32.mxu0 0.0
    %v1799 = vand.u32 %v1397, 4294901760
    %1800 = vmatmul.mubr.f32.gmra.mrb[0].mxu0 %v1799
    %v1801 = vpop.f32.mrb[0].mxu0
    %v1802 = vadd.f32 %v1546, %v1801
    %v1803 = vpop.f32.mrb[0].mxu0
    %v1804 = vadd.f32 %v1548, %v1803
    %1805 = vmatprep.mubr.f32.mxu0 0.0
    %v1806 = vand.u32 %v1400, 4294901760
    %1807 = vmatmul.mubr.f32.gmra.mrb[0].mxu0 %v1806
    %v1808 = vpop.f32.mrb[0].mxu0
    %v1809 = vadd.f32 %v1557, %v1808
    %v1810 = vpop.f32.mrb[0].mxu0
    %v1811 = vadd.f32 %v1559, %v1810
    %1812 = vmatprep.mubr.f32.mxu0 0.0
    %v1813 = vand.u32 %v1403, 4294901760
    %1814 = vmatmul.mubr.f32.gmra.mrb[0].mxu0 %v1813
    %v1815 = vpop.f32.mrb[0].mxu0
    %v1816 = vadd.f32 %v1568, %v1815
    %v1817 = vpop.f32.mrb[0].mxu0
    %v1818 = vadd.f32 %v1570, %v1817
    %1819 = vmatprep.mubr.f32.mxu0 0.0
    %v1820 = vand.u32 %v1406, 4294901760
    %1821 = vmatmul.mubr.f32.gmra.mrb[0].mxu0 %v1820
    %v1822 = vpop.f32.mrb[0].mxu0
    %v1823 = vadd.f32 %v1579, %v1822
    %v1824 = vpop.f32.mrb[0].mxu0
    %v1825 = vadd.f32 %v1581, %v1824
    %1826 = vdwg.mxu0
    %v1827 = vand.u32 %v1361, 4294901760
    %v1828 = vsub.f32 %v1361, %v1827
    %1829 = vmatprep.subr.mxu0 %v1828
    %v1830 = vand.u32 %v1360, 4294901760
    %v1831 = vsub.f32 %v1360, %v1830
    %1832 = vmatpush1.msra.mxu0 %v1831
    %v1833 = vand.u32 %v1363, 4294901760
    %v1834 = vsub.f32 %v1363, %v1833
    %1835 = vmatprep.subr.mxu0 %v1834
    %v1836 = vand.u32 %v1362, 4294901760
    %v1837 = vsub.f32 %v1362, %v1836
    %1838 = vmatpush1.msra.mxu0 %v1837
    %v1839 = vand.u32 %v1365, 4294901760
    %v1840 = vsub.f32 %v1365, %v1839
    %1841 = vmatprep.subr.mxu0 %v1840
    %v1842 = vand.u32 %v1364, 4294901760
    %v1843 = vsub.f32 %v1364, %v1842
    %1844 = vmatpush1.msra.mxu0 %v1843
    %v1845 = vand.u32 %v1367, 4294901760
    %v1846 = vsub.f32 %v1367, %v1845
    %1847 = vmatprep.subr.mxu0 %v1846
    %v1848 = vand.u32 %v1366, 4294901760
    %v1849 = vsub.f32 %v1366, %v1848
    %1850 = vmatpush1.msra.mxu0 %v1849
    %v1851 = vand.u32 %v1369, 4294901760
    %v1852 = vsub.f32 %v1369, %v1851
    %1853 = vmatprep.subr.mxu0 %v1852
    %v1854 = vand.u32 %v1368, 4294901760
    %v1855 = vsub.f32 %v1368, %v1854
    %1856 = vmatpush1.msra.mxu0 %v1855
    %v1857 = vand.u32 %v1371, 4294901760
    %v1858 = vsub.f32 %v1371, %v1857
    %1859 = vmatprep.subr.mxu0 %v1858
    %v1860 = vand.u32 %v1370, 4294901760
    %v1861 = vsub.f32 %v1370, %v1860
    %1862 = vmatpush1.msra.mxu0 %v1861
    %v1863 = vand.u32 %v1373, 4294901760
    %v1864 = vsub.f32 %v1373, %v1863
    %1865 = vmatprep.subr.mxu0 %v1864
    %v1866 = vand.u32 %v1372, 4294901760
    %v1867 = vsub.f32 %v1372, %v1866
    %1868 = vmatpush1.msra.mxu0 %v1867
    %v1869 = vand.u32 %v1375, 4294901760
    %v1870 = vsub.f32 %v1375, %v1869
    %1871 = vmatprep.subr.mxu0 %v1870
    %v1872 = vand.u32 %v1374, 4294901760
    %v1873 = vsub.f32 %v1374, %v1872
    %1874 = vmatpush1.msra.mxu0 %v1873
    %v1875 = vand.u32 %v1377, 4294901760
    %v1876 = vsub.f32 %v1377, %v1875
    %1877 = vmatprep.subr.mxu0 %v1876
    %v1878 = vand.u32 %v1376, 4294901760
    %v1879 = vsub.f32 %v1376, %v1878
    %1880 = vmatpush1.msra.mxu0 %v1879
    %v1881 = vand.u32 %v1379, 4294901760
    %v1882 = vsub.f32 %v1379, %v1881
    %1883 = vmatprep.subr.mxu0 %v1882
    %v1884 = vand.u32 %v1378, 4294901760
    %v1885 = vsub.f32 %v1378, %v1884
    %1886 = vmatpush1.msra.mxu0 %v1885
    %v1887 = vand.u32 %v1381, 4294901760
    %v1888 = vsub.f32 %v1381, %v1887
    %1889 = vmatprep.subr.mxu0 %v1888
    %v1890 = vand.u32 %v1380, 4294901760
    %v1891 = vsub.f32 %v1380, %v1890
    %1892 = vmatpush1.msra.mxu0 %v1891
    %v1893 = vand.u32 %v1383, 4294901760
    %v1894 = vsub.f32 %v1383, %v1893
    %1895 = vmatprep.subr.mxu0 %v1894
    %v1896 = vand.u32 %v1382, 4294901760
    %v1897 = vsub.f32 %v1382, %v1896
    %1898 = vmatpush1.msra.mxu0 %v1897
    %v1899 = vand.u32 %v1413, 4294901760
    %v1900 = vsub.f32 %v1413, %v1899
    %1901 = vmatprep.subr.mxu0 %v1900
    %v1902 = vand.u32 %v1410, 4294901760
    %v1903 = vsub.f32 %v1410, %v1902
    %1904 = vmatpush1.msra.mxu0 %v1903
    %1905 = vmatprep.subr.mxu0 0.0
    %1906 = vmatpush1.msra.mxu0 0.0
    %1907 = vmatprep.subr.mxu0 0.0
    %1908 = vmatpush1.msra.mxu0 0.0
    %1909 = vmatprep.subr.mxu0 0.0
    %1910 = vmatpush1.msra.mxu0 0.0
    %1911 = vmatprep.subr.mxu0 0.0
    %1912 = vmatpush1.msra.mxu0 0.0
    %1913 = vmatprep.subr.mxu0 0.0
    %1914 = vmatpush1.msra.mxu0 0.0
    %1915 = vmatprep.subr.mxu0 0.0
    %1916 = vmatpush1.msra.mxu0 0.0
    %1917 = vmatprep.subr.mxu0 0.0
    %1918 = vmatpush1.msra.mxu0 0.0
    %1919 = vmatprep.subr.mxu0 0.0
    %1920 = vmatpush1.msra.mxu0 0.0
    %1921 = vmatprep.subr.mxu0 0.0
    %1922 = vmatpush1.msra.mxu0 0.0
    %1923 = vmatprep.subr.mxu0 0.0
    %1924 = vmatpush1.msra.mxu0 0.0
    %1925 = vmatprep.subr.mxu0 0.0
    %1926 = vmatpush1.msra.mxu0 0.0
    %1927 = vmatprep.subr.mxu0 0.0
    %1928 = vmatpush1.msra.mxu0 0.0
    %1929 = vmatprep.subr.mxu0 0.0
    %1930 = vmatpush1.msra.mxu0 0.0
    %1931 = vmatprep.subr.mxu0 0.0
    %1932 = vmatpush1.msra.mxu0 0.0
    %1933 = vmatprep.subr.mxu0 0.0
    %1934 = vmatpush1.msra.mxu0 0.0
    %1935 = vmatprep.subr.mxu0 0.0
    %1936 = vmatpush1.msra.mxu0 0.0
    %1937 = vmatprep.subr.mxu0 0.0
    %1938 = vmatpush1.msra.mxu0 0.0
    %1939 = vmatprep.subr.mxu0 0.0
    %1940 = vmatpush1.msra.mxu0 0.0
    %1941 = vmatprep.subr.mxu0 0.0
    %1942 = vmatpush1.msra.mxu0 0.0
    %1943 = vmatprep.mubr.f32.mxu0 0.0
    %v1944 = vand.u32 %v1388, 4294901760
    %v1945 = vsub.f32 %v1388, %v1944
    %1946 = vmatmul.mubr.f32.gmra.mrb[0].mxu0 %v1945
    %v1947 = vpop.f32.mrb[0].mxu0
    %v1948 = vadd.f32 %v1781, %v1947
    %v1949 = vpop.f32.mrb[0].mxu0
    %v1950 = vadd.f32 %v1783, %v1949
    %1951 = vmatprep.mubr.f32.mxu0 0.0
    %v1952 = vand.u32 %v1391, 4294901760
    %v1953 = vsub.f32 %v1391, %v1952
    %1954 = vmatmul.mubr.f32.gmra.mrb[0].mxu0 %v1953
    %v1955 = vpop.f32.mrb[0].mxu0
    %v1956 = vadd.f32 %v1788, %v1955
    %v1957 = vpop.f32.mrb[0].mxu0
    %v1958 = vadd.f32 %v1790, %v1957
    %1959 = vmatprep.mubr.f32.mxu0 0.0
    %v1960 = vand.u32 %v1394, 4294901760
    %v1961 = vsub.f32 %v1394, %v1960
    %1962 = vmatmul.mubr.f32.gmra.mrb[0].mxu0 %v1961
    %v1963 = vpop.f32.mrb[0].mxu0
    %v1964 = vadd.f32 %v1795, %v1963
    %v1965 = vpop.f32.mrb[0].mxu0
    %v1966 = vadd.f32 %v1797, %v1965
    %1967 = vmatprep.mubr.f32.mxu0 0.0
    %v1968 = vand.u32 %v1397, 4294901760
    %v1969 = vsub.f32 %v1397, %v1968
    %1970 = vmatmul.mubr.f32.gmra.mrb[0].mxu0 %v1969
    %v1971 = vpop.f32.mrb[0].mxu0
    %v1972 = vadd.f32 %v1802, %v1971
    %v1973 = vpop.f32.mrb[0].mxu0
    %v1974 = vadd.f32 %v1804, %v1973
    %1975 = vmatprep.mubr.f32.mxu0 0.0
    %v1976 = vand.u32 %v1400, 4294901760
    %v1977 = vsub.f32 %v1400, %v1976
    %1978 = vmatmul.mubr.f32.gmra.mrb[0].mxu0 %v1977
    %v1979 = vpop.f32.mrb[0].mxu0
    %v1980 = vadd.f32 %v1809, %v1979
    %v1981 = vpop.f32.mrb[0].mxu0
    %v1982 = vadd.f32 %v1811, %v1981
    %1983 = vmatprep.mubr.f32.mxu0 0.0
    %v1984 = vand.u32 %v1403, 4294901760
    %v1985 = vsub.f32 %v1403, %v1984
    %1986 = vmatmul.mubr.f32.gmra.mrb[0].mxu0 %v1985
    %v1987 = vpop.f32.mrb[0].mxu0
    %v1988 = vadd.f32 %v1816, %v1987
    %v1989 = vpop.f32.mrb[0].mxu0
    %v1990 = vadd.f32 %v1818, %v1989
    %1991 = vmatprep.mubr.f32.mxu0 0.0
    %v1992 = vand.u32 %v1406, 4294901760
    %v1993 = vsub.f32 %v1406, %v1992
    %1994 = vmatmul.mubr.f32.gmra.mrb[0].mxu0 %v1993
    %v1995 = vpop.f32.mrb[0].mxu0
    %v1996 = vadd.f32 %v1823, %v1995
    %v1997 = vpop.f32.mrb[0].mxu0
    %v1998 = vadd.f32 %v1825, %v1997
    %1999 = vdwg.mxu0
    %v2000 = vand.u32 %v1361, 4294901760
    %2001 = vmatprep.subr.mxu0 %v2000
    %v2002 = vand.u32 %v1360, 4294901760
    %2003 = vmatpush1.msra.mxu0 %v2002
    %v2004 = vand.u32 %v1363, 4294901760
    %2005 = vmatprep.subr.mxu0 %v2004
    %v2006 = vand.u32 %v1362, 4294901760
    %2007 = vmatpush1.msra.mxu0 %v2006
    %v2008 = vand.u32 %v1365, 4294901760
    %2009 = vmatprep.subr.mxu0 %v2008
    %v2010 = vand.u32 %v1364, 4294901760
    %2011 = vmatpush1.msra.mxu0 %v2010
    %v2012 = vand.u32 %v1367, 4294901760
    %2013 = vmatprep.subr.mxu0 %v2012
    %v2014 = vand.u32 %v1366, 4294901760
    %2015 = vmatpush1.msra.mxu0 %v2014
    %v2016 = vand.u32 %v1369, 4294901760
    %2017 = vmatprep.subr.mxu0 %v2016
    %v2018 = vand.u32 %v1368, 4294901760
    %2019 = vmatpush1.msra.mxu0 %v2018
    %v2020 = vand.u32 %v1371, 4294901760
    %2021 = vmatprep.subr.mxu0 %v2020
    %v2022 = vand.u32 %v1370, 4294901760
    %2023 = vmatpush1.msra.mxu0 %v2022
    %v2024 = vand.u32 %v1373, 4294901760
    %2025 = vmatprep.subr.mxu0 %v2024
    %v2026 = vand.u32 %v1372, 4294901760
    %2027 = vmatpush1.msra.mxu0 %v2026
    %v2028 = vand.u32 %v1375, 4294901760
    %2029 = vmatprep.subr.mxu0 %v2028
    %v2030 = vand.u32 %v1374, 4294901760
    %2031 = vmatpush1.msra.mxu0 %v2030
    %v2032 = vand.u32 %v1377, 4294901760
    %2033 = vmatprep.subr.mxu0 %v2032
    %v2034 = vand.u32 %v1376, 4294901760
    %2035 = vmatpush1.msra.mxu0 %v2034
    %v2036 = vand.u32 %v1379, 4294901760
    %2037 = vmatprep.subr.mxu0 %v2036
    %v2038 = vand.u32 %v1378, 4294901760
    %2039 = vmatpush1.msra.mxu0 %v2038
    %v2040 = vand.u32 %v1381, 4294901760
    %2041 = vmatprep.subr.mxu0 %v2040
    %v2042 = vand.u32 %v1380, 4294901760
    %2043 = vmatpush1.msra.mxu0 %v2042
    %v2044 = vand.u32 %v1383, 4294901760
    %2045 = vmatprep.subr.mxu0 %v2044
    %v2046 = vand.u32 %v1382, 4294901760
    %2047 = vmatpush1.msra.mxu0 %v2046
    %v2048 = vand.u32 %v1413, 4294901760
    %2049 = vmatprep.subr.mxu0 %v2048
    %v2050 = vand.u32 %v1410, 4294901760
    %2051 = vmatpush1.msra.mxu0 %v2050
    %2052 = vmatprep.subr.mxu0 0.0
    %2053 = vmatpush1.msra.mxu0 0.0
    %2054 = vmatprep.subr.mxu0 0.0
    %2055 = vmatpush1.msra.mxu0 0.0
    %2056 = vmatprep.subr.mxu0 0.0
    %2057 = vmatpush1.msra.mxu0 0.0
    %2058 = vmatprep.subr.mxu0 0.0
    %2059 = vmatpush1.msra.mxu0 0.0
    %2060 = vmatprep.subr.mxu0 0.0
    %2061 = vmatpush1.msra.mxu0 0.0
    %2062 = vmatprep.subr.mxu0 0.0
    %2063 = vmatpush1.msra.mxu0 0.0
    %2064 = vmatprep.subr.mxu0 0.0
    %2065 = vmatpush1.msra.mxu0 0.0
    %2066 = vmatprep.subr.mxu0 0.0
    %2067 = vmatpush1.msra.mxu0 0.0
    %2068 = vmatprep.subr.mxu0 0.0
    %2069 = vmatpush1.msra.mxu0 0.0
    %2070 = vmatprep.subr.mxu0 0.0
    %2071 = vmatpush1.msra.mxu0 0.0
    %2072 = vmatprep.subr.mxu0 0.0
    %2073 = vmatpush1.msra.mxu0 0.0
    %2074 = vmatprep.subr.mxu0 0.0
    %2075 = vmatpush1.msra.mxu0 0.0
    %2076 = vmatprep.subr.mxu0 0.0
    %2077 = vmatpush1.msra.mxu0 0.0
    %2078 = vmatprep.subr.mxu0 0.0
    %2079 = vmatpush1.msra.mxu0 0.0
    %2080 = vmatprep.subr.mxu0 0.0
    %2081 = vmatpush1.msra.mxu0 0.0
    %2082 = vmatprep.subr.mxu0 0.0
    %2083 = vmatpush1.msra.mxu0 0.0
    %2084 = vmatprep.subr.mxu0 0.0
    %2085 = vmatpush1.msra.mxu0 0.0
    %2086 = vmatprep.subr.mxu0 0.0
    %2087 = vmatpush1.msra.mxu0 0.0
    %2088 = vmatprep.subr.mxu0 0.0
    %2089 = vmatpush1.msra.mxu0 0.0
    %2090 = vmatprep.mubr.f32.mxu0 0.0
    %v2091 = vand.u32 %v1388, 4294901760
    %v2092 = vsub.f32 %v1388, %v2091
    %v2093 = vand.u32 %v2092, 4294901760
    %2094 = vmatmul.mubr.f32.gmra.mrb[0].mxu0 %v2093
    %v2095 = vpop.f32.mrb[0].mxu0
    %v2096 = vadd.f32 %v1948, %v2095
    %v2097 = vpop.f32.mrb[0].mxu0
    %v2098 = vadd.f32 %v1950, %v2097
    %2099 = vmatprep.mubr.f32.mxu0 0.0
    %v2100 = vand.u32 %v1391, 4294901760
    %v2101 = vsub.f32 %v1391, %v2100
    %v2102 = vand.u32 %v2101, 4294901760
    %2103 = vmatmul.mubr.f32.gmra.mrb[0].mxu0 %v2102
    %v2104 = vpop.f32.mrb[0].mxu0
    %v2105 = vadd.f32 %v1956, %v2104
    %v2106 = vpop.f32.mrb[0].mxu0
    %v2107 = vadd.f32 %v1958, %v2106
    %2108 = vmatprep.mubr.f32.mxu0 0.0
    %v2109 = vand.u32 %v1394, 4294901760
    %v2110 = vsub.f32 %v1394, %v2109
    %v2111 = vand.u32 %v2110, 4294901760
    %2112 = vmatmul.mubr.f32.gmra.mrb[0].mxu0 %v2111
    %v2113 = vpop.f32.mrb[0].mxu0
    %v2114 = vadd.f32 %v1964, %v2113
    %v2115 = vpop.f32.mrb[0].mxu0
    %v2116 = vadd.f32 %v1966, %v2115
    %2117 = vmatprep.mubr.f32.mxu0 0.0
    %v2118 = vand.u32 %v1397, 4294901760
    %v2119 = vsub.f32 %v1397, %v2118
    %v2120 = vand.u32 %v2119, 4294901760
    %2121 = vmatmul.mubr.f32.gmra.mrb[0].mxu0 %v2120
    %v2122 = vpop.f32.mrb[0].mxu0
    %v2123 = vadd.f32 %v1972, %v2122
    %v2124 = vpop.f32.mrb[0].mxu0
    %v2125 = vadd.f32 %v1974, %v2124
    %2126 = vmatprep.mubr.f32.mxu0 0.0
    %v2127 = vand.u32 %v1400, 4294901760
    %v2128 = vsub.f32 %v1400, %v2127
    %v2129 = vand.u32 %v2128, 4294901760
    %2130 = vmatmul.mubr.f32.gmra.mrb[0].mxu0 %v2129
    %v2131 = vpop.f32.mrb[0].mxu0
    %v2132 = vadd.f32 %v1980, %v2131
    %v2133 = vpop.f32.mrb[0].mxu0
    %v2134 = vadd.f32 %v1982, %v2133
    %2135 = vmatprep.mubr.f32.mxu0 0.0
    %v2136 = vand.u32 %v1403, 4294901760
    %v2137 = vsub.f32 %v1403, %v2136
    %v2138 = vand.u32 %v2137, 4294901760
    %2139 = vmatmul.mubr.f32.gmra.mrb[0].mxu0 %v2138
    %v2140 = vpop.f32.mrb[0].mxu0
    %v2141 = vadd.f32 %v1988, %v2140
    %v2142 = vpop.f32.mrb[0].mxu0
    %v2143 = vadd.f32 %v1990, %v2142
    %2144 = vmatprep.mubr.f32.mxu0 0.0
    %v2145 = vand.u32 %v1406, 4294901760
    %v2146 = vsub.f32 %v1406, %v2145
    %v2147 = vand.u32 %v2146, 4294901760
    %2148 = vmatmul.mubr.f32.gmra.mrb[0].mxu0 %v2147
    %v2149 = vpop.f32.mrb[0].mxu0
    %v2150 = vadd.f32 %v1996, %v2149
    %v2151 = vpop.f32.mrb[0].mxu0
    %v2152 = vadd.f32 %v1998, %v2151
    %2153 = vdwg.mxu0
    %v2154 = vand.u32 %v1361, 4294901760
    %v2155 = vsub.f32 %v1361, %v2154
    %v2156 = vand.u32 %v2155, 4294901760
    %2157 = vmatprep.subr.mxu0 %v2156
    %v2158 = vand.u32 %v1360, 4294901760
    %v2159 = vsub.f32 %v1360, %v2158
    %v2160 = vand.u32 %v2159, 4294901760
    %2161 = vmatpush1.msra.mxu0 %v2160
    %v2162 = vand.u32 %v1363, 4294901760
    %v2163 = vsub.f32 %v1363, %v2162
    %v2164 = vand.u32 %v2163, 4294901760
    %2165 = vmatprep.subr.mxu0 %v2164
    %v2166 = vand.u32 %v1362, 4294901760
    %v2167 = vsub.f32 %v1362, %v2166
    %v2168 = vand.u32 %v2167, 4294901760
    %2169 = vmatpush1.msra.mxu0 %v2168
    %v2170 = vand.u32 %v1365, 4294901760
    %v2171 = vsub.f32 %v1365, %v2170
    %v2172 = vand.u32 %v2171, 4294901760
    %2173 = vmatprep.subr.mxu0 %v2172
    %v2174 = vand.u32 %v1364, 4294901760
    %v2175 = vsub.f32 %v1364, %v2174
    %v2176 = vand.u32 %v2175, 4294901760
    %2177 = vmatpush1.msra.mxu0 %v2176
    %v2178 = vand.u32 %v1367, 4294901760
    %v2179 = vsub.f32 %v1367, %v2178
    %v2180 = vand.u32 %v2179, 4294901760
    %2181 = vmatprep.subr.mxu0 %v2180
    %v2182 = vand.u32 %v1366, 4294901760
    %v2183 = vsub.f32 %v1366, %v2182
    %v2184 = vand.u32 %v2183, 4294901760
    %2185 = vmatpush1.msra.mxu0 %v2184
    %v2186 = vand.u32 %v1369, 4294901760
    %v2187 = vsub.f32 %v1369, %v2186
    %v2188 = vand.u32 %v2187, 4294901760
    %2189 = vmatprep.subr.mxu0 %v2188
    %v2190 = vand.u32 %v1368, 4294901760
    %v2191 = vsub.f32 %v1368, %v2190
    %v2192 = vand.u32 %v2191, 4294901760
    %2193 = vmatpush1.msra.mxu0 %v2192
    %v2194 = vand.u32 %v1371, 4294901760
    %v2195 = vsub.f32 %v1371, %v2194
    %v2196 = vand.u32 %v2195, 4294901760
    %2197 = vmatprep.subr.mxu0 %v2196
    %v2198 = vand.u32 %v1370, 4294901760
    %v2199 = vsub.f32 %v1370, %v2198
    %v2200 = vand.u32 %v2199, 4294901760
    %2201 = vmatpush1.msra.mxu0 %v2200
    %v2202 = vand.u32 %v1373, 4294901760
    %v2203 = vsub.f32 %v1373, %v2202
    %v2204 = vand.u32 %v2203, 4294901760
    %2205 = vmatprep.subr.mxu0 %v2204
    %v2206 = vand.u32 %v1372, 4294901760
    %v2207 = vsub.f32 %v1372, %v2206
    %v2208 = vand.u32 %v2207, 4294901760
    %2209 = vmatpush1.msra.mxu0 %v2208
    %v2210 = vand.u32 %v1375, 4294901760
    %v2211 = vsub.f32 %v1375, %v2210
    %v2212 = vand.u32 %v2211, 4294901760
    %2213 = vmatprep.subr.mxu0 %v2212
    %v2214 = vand.u32 %v1374, 4294901760
    %v2215 = vsub.f32 %v1374, %v2214
    %v2216 = vand.u32 %v2215, 4294901760
    %2217 = vmatpush1.msra.mxu0 %v2216
    %v2218 = vand.u32 %v1377, 4294901760
    %v2219 = vsub.f32 %v1377, %v2218
    %v2220 = vand.u32 %v2219, 4294901760
    %2221 = vmatprep.subr.mxu0 %v2220
    %v2222 = vand.u32 %v1376, 4294901760
    %v2223 = vsub.f32 %v1376, %v2222
    %v2224 = vand.u32 %v2223, 4294901760
    %2225 = vmatpush1.msra.mxu0 %v2224
    %v2226 = vand.u32 %v1379, 4294901760
    %v2227 = vsub.f32 %v1379, %v2226
    %v2228 = vand.u32 %v2227, 4294901760
    %2229 = vmatprep.subr.mxu0 %v2228
    %v2230 = vand.u32 %v1378, 4294901760
    %v2231 = vsub.f32 %v1378, %v2230
    %v2232 = vand.u32 %v2231, 4294901760
    %2233 = vmatpush1.msra.mxu0 %v2232
    %v2234 = vand.u32 %v1381, 4294901760
    %v2235 = vsub.f32 %v1381, %v2234
    %v2236 = vand.u32 %v2235, 4294901760
    %2237 = vmatprep.subr.mxu0 %v2236
    %v2238 = vand.u32 %v1380, 4294901760
    %v2239 = vsub.f32 %v1380, %v2238
    %v2240 = vand.u32 %v2239, 4294901760
    %2241 = vmatpush1.msra.mxu0 %v2240
    %v2242 = vand.u32 %v1383, 4294901760
    %v2243 = vsub.f32 %v1383, %v2242
    %v2244 = vand.u32 %v2243, 4294901760
    %2245 = vmatprep.subr.mxu0 %v2244
    %v2246 = vand.u32 %v1382, 4294901760
    %v2247 = vsub.f32 %v1382, %v2246
    %v2248 = vand.u32 %v2247, 4294901760
    %2249 = vmatpush1.msra.mxu0 %v2248
    %v2250 = vand.u32 %v1413, 4294901760
    %v2251 = vsub.f32 %v1413, %v2250
    %v2252 = vand.u32 %v2251, 4294901760
    %2253 = vmatprep.subr.mxu0 %v2252
    %v2254 = vand.u32 %v1410, 4294901760
    %v2255 = vsub.f32 %v1410, %v2254
    %v2256 = vand.u32 %v2255, 4294901760
    %2257 = vmatpush1.msra.mxu0 %v2256
    %2258 = vmatprep.subr.mxu0 0.0
    %2259 = vmatpush1.msra.mxu0 0.0
    %2260 = vmatprep.subr.mxu0 0.0
    %2261 = vmatpush1.msra.mxu0 0.0
    %2262 = vmatprep.subr.mxu0 0.0
    %2263 = vmatpush1.msra.mxu0 0.0
    %2264 = vmatprep.subr.mxu0 0.0
    %2265 = vmatpush1.msra.mxu0 0.0
    %2266 = vmatprep.subr.mxu0 0.0
    %2267 = vmatpush1.msra.mxu0 0.0
    %2268 = vmatprep.subr.mxu0 0.0
    %2269 = vmatpush1.msra.mxu0 0.0
    %2270 = vmatprep.subr.mxu0 0.0
    %2271 = vmatpush1.msra.mxu0 0.0
    %2272 = vmatprep.subr.mxu0 0.0
    %2273 = vmatpush1.msra.mxu0 0.0
    %2274 = vmatprep.subr.mxu0 0.0
    %2275 = vmatpush1.msra.mxu0 0.0
    %2276 = vmatprep.subr.mxu0 0.0
    %2277 = vmatpush1.msra.mxu0 0.0
    %2278 = vmatprep.subr.mxu0 0.0
    %2279 = vmatpush1.msra.mxu0 0.0
    %2280 = vmatprep.subr.mxu0 0.0
    %2281 = vmatpush1.msra.mxu0 0.0
    %2282 = vmatprep.subr.mxu0 0.0
    %2283 = vmatpush1.msra.mxu0 0.0
    %2284 = vmatprep.subr.mxu0 0.0
    %2285 = vmatpush1.msra.mxu0 0.0
    %2286 = vmatprep.subr.mxu0 0.0
    %2287 = vmatpush1.msra.mxu0 0.0
    %2288 = vmatprep.subr.mxu0 0.0
    %2289 = vmatpush1.msra.mxu0 0.0
    %2290 = vmatprep.subr.mxu0 0.0
    %2291 = vmatpush1.msra.mxu0 0.0
    %2292 = vmatprep.subr.mxu0 0.0
    %2293 = vmatpush1.msra.mxu0 0.0
    %2294 = vmatprep.subr.mxu0 0.0
    %2295 = vmatpush1.msra.mxu0 0.0
    %2296 = vmatprep.mubr.f32.mxu0 0.0
    %v2297 = vand.u32 %v1388, 4294901760
    %2298 = vmatmul.mubr.f32.gmra.mrb[0].mxu0 %v2297
    %v2299 = vpop.f32.mrb[0].mxu0
    %v2300 = vadd.f32 %v2096, %v2299
    %v2301 = vpop.f32.mrb[0].mxu0
    %v2302 = vadd.f32 %v2098, %v2301
    %2303 = vmatprep.mubr.f32.mxu0 0.0
    %v2304 = vand.u32 %v1391, 4294901760
    %2305 = vmatmul.mubr.f32.gmra.mrb[0].mxu0 %v2304
    %v2306 = vpop.f32.mrb[0].mxu0
    %v2307 = vadd.f32 %v2105, %v2306
    %v2308 = vpop.f32.mrb[0].mxu0
    %v2309 = vadd.f32 %v2107, %v2308
    %2310 = vmatprep.mubr.f32.mxu0 0.0
    %v2311 = vand.u32 %v1394, 4294901760
    %2312 = vmatmul.mubr.f32.gmra.mrb[0].mxu0 %v2311
    %v2313 = vpop.f32.mrb[0].mxu0
    %v2314 = vadd.f32 %v2114, %v2313
    %v2315 = vpop.f32.mrb[0].mxu0
    %v2316 = vadd.f32 %v2116, %v2315
    %2317 = vmatprep.mubr.f32.mxu0 0.0
    %v2318 = vand.u32 %v1397, 4294901760
    %2319 = vmatmul.mubr.f32.gmra.mrb[0].mxu0 %v2318
    %v2320 = vpop.f32.mrb[0].mxu0
    %v2321 = vadd.f32 %v2123, %v2320
    %v2322 = vpop.f32.mrb[0].mxu0
    %v2323 = vadd.f32 %v2125, %v2322
    %2324 = vmatprep.mubr.f32.mxu0 0.0
    %v2325 = vand.u32 %v1400, 4294901760
    %2326 = vmatmul.mubr.f32.gmra.mrb[0].mxu0 %v2325
    %v2327 = vpop.f32.mrb[0].mxu0
    %v2328 = vadd.f32 %v2132, %v2327
    %v2329 = vpop.f32.mrb[0].mxu0
    %v2330 = vadd.f32 %v2134, %v2329
    %2331 = vmatprep.mubr.f32.mxu0 0.0
    %v2332 = vand.u32 %v1403, 4294901760
    %2333 = vmatmul.mubr.f32.gmra.mrb[0].mxu0 %v2332
    %v2334 = vpop.f32.mrb[0].mxu0
    %v2335 = vadd.f32 %v2141, %v2334
    %v2336 = vpop.f32.mrb[0].mxu0
    %v2337 = vadd.f32 %v2143, %v2336
    %2338 = vmatprep.mubr.f32.mxu0 0.0
    %v2339 = vand.u32 %v1406, 4294901760
    %2340 = vmatmul.mubr.f32.gmra.mrb[0].mxu0 %v2339
    %v2341 = vpop.f32.mrb[0].mxu0
    %v2342 = vadd.f32 %v2150, %v2341
    %v2343 = vpop.f32.mrb[0].mxu0
    %v2344 = vadd.f32 %v2152, %v2343
    %2345 = vdwg.mxu0
    %v2346 = vand.u32 %v1361, 4294901760
    %2347 = vmatprep.subr.mxu0 %v2346
    %v2348 = vand.u32 %v1360, 4294901760
    %2349 = vmatpush1.msra.mxu0 %v2348
    %v2350 = vand.u32 %v1363, 4294901760
    %2351 = vmatprep.subr.mxu0 %v2350
    %v2352 = vand.u32 %v1362, 4294901760
    %2353 = vmatpush1.msra.mxu0 %v2352
    %v2354 = vand.u32 %v1365, 4294901760
    %2355 = vmatprep.subr.mxu0 %v2354
    %v2356 = vand.u32 %v1364, 4294901760
    %2357 = vmatpush1.msra.mxu0 %v2356
    %v2358 = vand.u32 %v1367, 4294901760
    %2359 = vmatprep.subr.mxu0 %v2358
    %v2360 = vand.u32 %v1366, 4294901760
    %2361 = vmatpush1.msra.mxu0 %v2360
    %v2362 = vand.u32 %v1369, 4294901760
    %2363 = vmatprep.subr.mxu0 %v2362
    %v2364 = vand.u32 %v1368, 4294901760
    %2365 = vmatpush1.msra.mxu0 %v2364
    %v2366 = vand.u32 %v1371, 4294901760
    %2367 = vmatprep.subr.mxu0 %v2366
    %v2368 = vand.u32 %v1370, 4294901760
    %2369 = vmatpush1.msra.mxu0 %v2368
    %v2370 = vand.u32 %v1373, 4294901760
    %2371 = vmatprep.subr.mxu0 %v2370
    %v2372 = vand.u32 %v1372, 4294901760
    %2373 = vmatpush1.msra.mxu0 %v2372
    %v2374 = vand.u32 %v1375, 4294901760
    %2375 = vmatprep.subr.mxu0 %v2374
    %v2376 = vand.u32 %v1374, 4294901760
    %2377 = vmatpush1.msra.mxu0 %v2376
    %v2378 = vand.u32 %v1377, 4294901760
    %2379 = vmatprep.subr.mxu0 %v2378
    %v2380 = vand.u32 %v1376, 4294901760
    %2381 = vmatpush1.msra.mxu0 %v2380
    %v2382 = vand.u32 %v1379, 4294901760
    %2383 = vmatprep.subr.mxu0 %v2382
    %v2384 = vand.u32 %v1378, 4294901760
    %2385 = vmatpush1.msra.mxu0 %v2384
    %v2386 = vand.u32 %v1381, 4294901760
    %2387 = vmatprep.subr.mxu0 %v2386
    %v2388 = vand.u32 %v1380, 4294901760
    %2389 = vmatpush1.msra.mxu0 %v2388
    %v2390 = vand.u32 %v1383, 4294901760
    %2391 = vmatprep.subr.mxu0 %v2390
    %v2392 = vand.u32 %v1382, 4294901760
    %2393 = vmatpush1.msra.mxu0 %v2392
    %v2394 = vand.u32 %v1413, 4294901760
    %2395 = vmatprep.subr.mxu0 %v2394
    %v2396 = vand.u32 %v1410, 4294901760
    %2397 = vmatpush1.msra.mxu0 %v2396
    %2398 = vmatprep.subr.mxu0 0.0
    %2399 = vmatpush1.msra.mxu0 0.0
    %2400 = vmatprep.subr.mxu0 0.0
    %2401 = vmatpush1.msra.mxu0 0.0
    %2402 = vmatprep.subr.mxu0 0.0
    %2403 = vmatpush1.msra.mxu0 0.0
    %2404 = vmatprep.subr.mxu0 0.0
    %2405 = vmatpush1.msra.mxu0 0.0
    %2406 = vmatprep.subr.mxu0 0.0
    %2407 = vmatpush1.msra.mxu0 0.0
    %2408 = vmatprep.subr.mxu0 0.0
    %2409 = vmatpush1.msra.mxu0 0.0
    %2410 = vmatprep.subr.mxu0 0.0
    %2411 = vmatpush1.msra.mxu0 0.0
    %2412 = vmatprep.subr.mxu0 0.0
    %2413 = vmatpush1.msra.mxu0 0.0
    %2414 = vmatprep.subr.mxu0 0.0
    %2415 = vmatpush1.msra.mxu0 0.0
    %2416 = vmatprep.subr.mxu0 0.0
    %2417 = vmatpush1.msra.mxu0 0.0
    %2418 = vmatprep.subr.mxu0 0.0
    %2419 = vmatpush1.msra.mxu0 0.0
    %2420 = vmatprep.subr.mxu0 0.0
    %2421 = vmatpush1.msra.mxu0 0.0
    %2422 = vmatprep.subr.mxu0 0.0
    %2423 = vmatpush1.msra.mxu0 0.0
    %2424 = vmatprep.subr.mxu0 0.0
    %2425 = vmatpush1.msra.mxu0 0.0
    %2426 = vmatprep.subr.mxu0 0.0
    %2427 = vmatpush1.msra.mxu0 0.0
    %2428 = vmatprep.subr.mxu0 0.0
    %2429 = vmatpush1.msra.mxu0 0.0
    %2430 = vmatprep.subr.mxu0 0.0
    %2431 = vmatpush1.msra.mxu0 0.0
    %2432 = vmatprep.subr.mxu0 0.0
    %2433 = vmatpush1.msra.mxu0 0.0
    %2434 = vmatprep.subr.mxu0 0.0
    %2435 = vmatpush1.msra.mxu0 0.0
    %2436 = vmatprep.mubr.f32.mxu0 0.0
    %v2437 = vand.u32 %v1388, 4294901760
    %2438 = vmatmul.mubr.f32.gmra.mrb[0].mxu0 %v2437
    %v2439 = vpop.f32.mrb[0].mxu0
    %v2440 = vadd.f32 %v2300, %v2439
    %v2441 = vpop.f32.mrb[0].mxu0
    %v2442 = vadd.f32 %v2302, %v2441
    %2443 = vmatprep.mubr.f32.mxu0 0.0
    %v2444 = vand.u32 %v1391, 4294901760
    %2445 = vmatmul.mubr.f32.gmra.mrb[0].mxu0 %v2444
    %v2446 = vpop.f32.mrb[0].mxu0
    %v2447 = vadd.f32 %v2307, %v2446
    %v2448 = vpop.f32.mrb[0].mxu0
    %v2449 = vadd.f32 %v2309, %v2448
    %2450 = vmatprep.mubr.f32.mxu0 0.0
    %v2451 = vand.u32 %v1394, 4294901760
    %2452 = vmatmul.mubr.f32.gmra.mrb[0].mxu0 %v2451
    %v2453 = vpop.f32.mrb[0].mxu0
    %v2454 = vadd.f32 %v2314, %v2453
    %v2455 = vpop.f32.mrb[0].mxu0
    %v2456 = vadd.f32 %v2316, %v2455
    %2457 = vmatprep.mubr.f32.mxu0 0.0
    %v2458 = vand.u32 %v1397, 4294901760
    %2459 = vmatmul.mubr.f32.gmra.mrb[0].mxu0 %v2458
    %v2460 = vpop.f32.mrb[0].mxu0
    %v2461 = vadd.f32 %v2321, %v2460
    %v2462 = vpop.f32.mrb[0].mxu0
    %v2463 = vadd.f32 %v2323, %v2462
    %2464 = vmatprep.mubr.f32.mxu0 0.0
    %v2465 = vand.u32 %v1400, 4294901760
    %2466 = vmatmul.mubr.f32.gmra.mrb[0].mxu0 %v2465
    %v2467 = vpop.f32.mrb[0].mxu0
    %v2468 = vadd.f32 %v2328, %v2467
    %v2469 = vpop.f32.mrb[0].mxu0
    %v2470 = vadd.f32 %v2330, %v2469
    %2471 = vmatprep.mubr.f32.mxu0 0.0
    %v2472 = vand.u32 %v1403, 4294901760
    %2473 = vmatmul.mubr.f32.gmra.mrb[0].mxu0 %v2472
    %v2474 = vpop.f32.mrb[0].mxu0
    %v2475 = vadd.f32 %v2335, %v2474
    %v2476 = vpop.f32.mrb[0].mxu0
    %v2477 = vadd.f32 %v2337, %v2476
    %2478 = vmatprep.mubr.f32.mxu0 0.0
    %v2479 = vand.u32 %v1406, 4294901760
    %2480 = vmatmul.mubr.f32.gmra.mrb[0].mxu0 %v2479
    %v2481 = vpop.f32.mrb[0].mxu0
    %v2482 = vadd.f32 %v2342, %v2481
    %v2483 = vpop.f32.mrb[0].mxu0
    %v2484 = vadd.f32 %v2344, %v2483
    %2485 = vdwg.mxu0
    %v2486 = vmax.f32 %v2440, 0.0
    %v2487 = vmax.f32 %v2442, 0.0
    %v2488 = vmax.f32 %v2447, 0.0
    %v2489 = vmax.f32 %v2449, 0.0
    %v2490 = vmax.f32 %v2454, 0.0
    %v2491 = vmax.f32 %v2456, 0.0
    %v2492 = vmax.f32 %v2461, 0.0
    %v2493 = vmax.f32 %v2463, 0.0
    %v2494 = vmax.f32 %v2468, 0.0
    %v2495 = vmax.f32 %v2470, 0.0
    %v2496 = vmax.f32 %v2475, 0.0
    %v2497 = vmax.f32 %v2477, 0.0
    %v2498 = vmax.f32 %v2482, 0.0
    %v2499 = vmax.f32 %v2484, 0.0
    %vm2500 = vcmask 408576
    %v2502 = vsel %vm2500, %v47, 0
    %v2505 = vsel %vm222, %v2498, 0
    %v2508 = vsel %vm222, %v2499, 0
    %v2510 = vand.u32 %v2487, 4294901760
    %2511 = vmatprep.subr.mxu0 %v2510
    %v2512 = vand.u32 %v2486, 4294901760
    %2513 = vmatpush1.msra.mxu0 %v2512
    %v2514 = vand.u32 %v2489, 4294901760
    %2515 = vmatprep.subr.mxu0 %v2514
    %v2516 = vand.u32 %v2488, 4294901760
    %2517 = vmatpush1.msra.mxu0 %v2516
    %v2518 = vand.u32 %v2491, 4294901760
    %2519 = vmatprep.subr.mxu0 %v2518
    %v2520 = vand.u32 %v2490, 4294901760
    %2521 = vmatpush1.msra.mxu0 %v2520
    %v2522 = vand.u32 %v2493, 4294901760
    %2523 = vmatprep.subr.mxu0 %v2522
    %v2524 = vand.u32 %v2492, 4294901760
    %2525 = vmatpush1.msra.mxu0 %v2524
    %v2526 = vand.u32 %v2495, 4294901760
    %2527 = vmatprep.subr.mxu0 %v2526
    %v2528 = vand.u32 %v2494, 4294901760
    %2529 = vmatpush1.msra.mxu0 %v2528
    %v2530 = vand.u32 %v2497, 4294901760
    %2531 = vmatprep.subr.mxu0 %v2530
    %v2532 = vand.u32 %v2496, 4294901760
    %2533 = vmatpush1.msra.mxu0 %v2532
    %v2534 = vand.u32 %v2508, 4294901760
    %2535 = vmatprep.subr.mxu0 %v2534
    %v2536 = vand.u32 %v2505, 4294901760
    %2537 = vmatpush1.msra.mxu0 %v2536
    %2538 = vmatprep.subr.mxu0 0.0
    %2539 = vmatpush1.msra.mxu0 0.0
    %2540 = vmatprep.subr.mxu0 0.0
    %2541 = vmatpush1.msra.mxu0 0.0
    %2542 = vmatprep.subr.mxu0 0.0
    %2543 = vmatpush1.msra.mxu0 0.0
    %2544 = vmatprep.subr.mxu0 0.0
    %2545 = vmatpush1.msra.mxu0 0.0
    %2546 = vmatprep.subr.mxu0 0.0
    %2547 = vmatpush1.msra.mxu0 0.0
    %2548 = vmatprep.subr.mxu0 0.0
    %2549 = vmatpush1.msra.mxu0 0.0
    %2550 = vmatprep.subr.mxu0 0.0
    %2551 = vmatpush1.msra.mxu0 0.0
    %2552 = vmatprep.subr.mxu0 0.0
    %2553 = vmatpush1.msra.mxu0 0.0
    %2554 = vmatprep.subr.mxu0 0.0
    %2555 = vmatpush1.msra.mxu0 0.0
    %2556 = vmatprep.subr.mxu0 0.0
    %2557 = vmatpush1.msra.mxu0 0.0
    %2558 = vmatprep.subr.mxu0 0.0
    %2559 = vmatpush1.msra.mxu0 0.0
    %2560 = vmatprep.subr.mxu0 0.0
    %2561 = vmatpush1.msra.mxu0 0.0
    %2562 = vmatprep.subr.mxu0 0.0
    %2563 = vmatpush1.msra.mxu0 0.0
    %2564 = vmatprep.subr.mxu0 0.0
    %2565 = vmatpush1.msra.mxu0 0.0
    %2566 = vmatprep.subr.mxu0 0.0
    %2567 = vmatpush1.msra.mxu0 0.0
    %2568 = vmatprep.subr.mxu0 0.0
    %2569 = vmatpush1.msra.mxu0 0.0
    %2570 = vmatprep.subr.mxu0 0.0
    %2571 = vmatpush1.msra.mxu0 0.0
    %2572 = vmatprep.subr.mxu0 0.0
    %2573 = vmatpush1.msra.mxu0 0.0
    %2574 = vmatprep.subr.mxu0 0.0
    %2575 = vmatpush1.msra.mxu0 0.0
    %2576 = vmatprep.subr.mxu0 0.0
    %2577 = vmatpush1.msra.mxu0 0.0
    %2578 = vmatprep.subr.mxu0 0.0
    %2579 = vmatpush1.msra.mxu0 0.0
    %2580 = vmatprep.subr.mxu0 0.0
    %2581 = vmatpush1.msra.mxu0 0.0
    %2582 = vmatprep.subr.mxu0 0.0
    %2583 = vmatpush1.msra.mxu0 0.0
    %2584 = vmatprep.subr.mxu0 0.0
    %2585 = vmatpush1.msra.mxu0 0.0
    %2586 = vmatprep.subr.mxu0 0.0
    %2587 = vmatpush1.msra.mxu0 0.0
    %2588 = vmatprep.mubr.f32.mxu0 0.0
    %v2589 = vand.u32 %v2502, 4294901760
    %v2590 = vsub.f32 %v2502, %v2589
    %v2591 = vand.u32 %v2590, 4294901760
    %v2592 = vsub.f32 %v2590, %v2591
    %v2593 = vand.u32 %v2592, 4294901760
    %2594 = vmatmul.mubr.f32.gmra.mrb[0].mxu0 %v2593
    %v2595 = vpop.f32.mrb[0].mxu0
    %v2596 = vadd.f32 %v172, %v2595
    %v2597 = vpop.f32.mrb[0].mxu0
    %v2598 = vadd.f32 %v172, %v2597
    %2599 = vdwg.mxu0
    %v2600 = vand.u32 %v2487, 4294901760
    %v2601 = vsub.f32 %v2487, %v2600
    %v2602 = vand.u32 %v2601, 4294901760
    %v2603 = vsub.f32 %v2601, %v2602
    %v2604 = vand.u32 %v2603, 4294901760
    %2605 = vmatprep.subr.mxu0 %v2604
    %v2606 = vand.u32 %v2486, 4294901760
    %v2607 = vsub.f32 %v2486, %v2606
    %v2608 = vand.u32 %v2607, 4294901760
    %v2609 = vsub.f32 %v2607, %v2608
    %v2610 = vand.u32 %v2609, 4294901760
    %2611 = vmatpush1.msra.mxu0 %v2610
    %v2612 = vand.u32 %v2489, 4294901760
    %v2613 = vsub.f32 %v2489, %v2612
    %v2614 = vand.u32 %v2613, 4294901760
    %v2615 = vsub.f32 %v2613, %v2614
    %v2616 = vand.u32 %v2615, 4294901760
    %2617 = vmatprep.subr.mxu0 %v2616
    %v2618 = vand.u32 %v2488, 4294901760
    %v2619 = vsub.f32 %v2488, %v2618
    %v2620 = vand.u32 %v2619, 4294901760
    %v2621 = vsub.f32 %v2619, %v2620
    %v2622 = vand.u32 %v2621, 4294901760
    %2623 = vmatpush1.msra.mxu0 %v2622
    %v2624 = vand.u32 %v2491, 4294901760
    %v2625 = vsub.f32 %v2491, %v2624
    %v2626 = vand.u32 %v2625, 4294901760
    %v2627 = vsub.f32 %v2625, %v2626
    %v2628 = vand.u32 %v2627, 4294901760
    %2629 = vmatprep.subr.mxu0 %v2628
    %v2630 = vand.u32 %v2490, 4294901760
    %v2631 = vsub.f32 %v2490, %v2630
    %v2632 = vand.u32 %v2631, 4294901760
    %v2633 = vsub.f32 %v2631, %v2632
    %v2634 = vand.u32 %v2633, 4294901760
    %2635 = vmatpush1.msra.mxu0 %v2634
    %v2636 = vand.u32 %v2493, 4294901760
    %v2637 = vsub.f32 %v2493, %v2636
    %v2638 = vand.u32 %v2637, 4294901760
    %v2639 = vsub.f32 %v2637, %v2638
    %v2640 = vand.u32 %v2639, 4294901760
    %2641 = vmatprep.subr.mxu0 %v2640
    %v2642 = vand.u32 %v2492, 4294901760
    %v2643 = vsub.f32 %v2492, %v2642
    %v2644 = vand.u32 %v2643, 4294901760
    %v2645 = vsub.f32 %v2643, %v2644
    %v2646 = vand.u32 %v2645, 4294901760
    %2647 = vmatpush1.msra.mxu0 %v2646
    %v2648 = vand.u32 %v2495, 4294901760
    %v2649 = vsub.f32 %v2495, %v2648
    %v2650 = vand.u32 %v2649, 4294901760
    %v2651 = vsub.f32 %v2649, %v2650
    %v2652 = vand.u32 %v2651, 4294901760
    %2653 = vmatprep.subr.mxu0 %v2652
    %v2654 = vand.u32 %v2494, 4294901760
    %v2655 = vsub.f32 %v2494, %v2654
    %v2656 = vand.u32 %v2655, 4294901760
    %v2657 = vsub.f32 %v2655, %v2656
    %v2658 = vand.u32 %v2657, 4294901760
    %2659 = vmatpush1.msra.mxu0 %v2658
    %v2660 = vand.u32 %v2497, 4294901760
    %v2661 = vsub.f32 %v2497, %v2660
    %v2662 = vand.u32 %v2661, 4294901760
    %v2663 = vsub.f32 %v2661, %v2662
    %v2664 = vand.u32 %v2663, 4294901760
    %2665 = vmatprep.subr.mxu0 %v2664
    %v2666 = vand.u32 %v2496, 4294901760
    %v2667 = vsub.f32 %v2496, %v2666
    %v2668 = vand.u32 %v2667, 4294901760
    %v2669 = vsub.f32 %v2667, %v2668
    %v2670 = vand.u32 %v2669, 4294901760
    %2671 = vmatpush1.msra.mxu0 %v2670
    %v2672 = vand.u32 %v2508, 4294901760
    %v2673 = vsub.f32 %v2508, %v2672
    %v2674 = vand.u32 %v2673, 4294901760
    %v2675 = vsub.f32 %v2673, %v2674
    %v2676 = vand.u32 %v2675, 4294901760
    %2677 = vmatprep.subr.mxu0 %v2676
    %v2678 = vand.u32 %v2505, 4294901760
    %v2679 = vsub.f32 %v2505, %v2678
    %v2680 = vand.u32 %v2679, 4294901760
    %v2681 = vsub.f32 %v2679, %v2680
    %v2682 = vand.u32 %v2681, 4294901760
    %2683 = vmatpush1.msra.mxu0 %v2682
    %2684 = vmatprep.subr.mxu0 0.0
    %2685 = vmatpush1.msra.mxu0 0.0
    %2686 = vmatprep.subr.mxu0 0.0
    %2687 = vmatpush1.msra.mxu0 0.0
    %2688 = vmatprep.subr.mxu0 0.0
    %2689 = vmatpush1.msra.mxu0 0.0
    %2690 = vmatprep.subr.mxu0 0.0
    %2691 = vmatpush1.msra.mxu0 0.0
    %2692 = vmatprep.subr.mxu0 0.0
    %2693 = vmatpush1.msra.mxu0 0.0
    %2694 = vmatprep.subr.mxu0 0.0
    %2695 = vmatpush1.msra.mxu0 0.0
    %2696 = vmatprep.subr.mxu0 0.0
    %2697 = vmatpush1.msra.mxu0 0.0
    %2698 = vmatprep.subr.mxu0 0.0
    %2699 = vmatpush1.msra.mxu0 0.0
    %2700 = vmatprep.subr.mxu0 0.0
    %2701 = vmatpush1.msra.mxu0 0.0
    %2702 = vmatprep.subr.mxu0 0.0
    %2703 = vmatpush1.msra.mxu0 0.0
    %2704 = vmatprep.subr.mxu0 0.0
    %2705 = vmatpush1.msra.mxu0 0.0
    %2706 = vmatprep.subr.mxu0 0.0
    %2707 = vmatpush1.msra.mxu0 0.0
    %2708 = vmatprep.subr.mxu0 0.0
    %2709 = vmatpush1.msra.mxu0 0.0
    %2710 = vmatprep.subr.mxu0 0.0
    %2711 = vmatpush1.msra.mxu0 0.0
    %2712 = vmatprep.subr.mxu0 0.0
    %2713 = vmatpush1.msra.mxu0 0.0
    %2714 = vmatprep.subr.mxu0 0.0
    %2715 = vmatpush1.msra.mxu0 0.0
    %2716 = vmatprep.subr.mxu0 0.0
    %2717 = vmatpush1.msra.mxu0 0.0
    %2718 = vmatprep.subr.mxu0 0.0
    %2719 = vmatpush1.msra.mxu0 0.0
    %2720 = vmatprep.subr.mxu0 0.0
    %2721 = vmatpush1.msra.mxu0 0.0
    %2722 = vmatprep.subr.mxu0 0.0
    %2723 = vmatpush1.msra.mxu0 0.0
    %2724 = vmatprep.subr.mxu0 0.0
    %2725 = vmatpush1.msra.mxu0 0.0
    %2726 = vmatprep.subr.mxu0 0.0
    %2727 = vmatpush1.msra.mxu0 0.0
    %2728 = vmatprep.subr.mxu0 0.0
    %2729 = vmatpush1.msra.mxu0 0.0
    %2730 = vmatprep.subr.mxu0 0.0
    %2731 = vmatpush1.msra.mxu0 0.0
    %2732 = vmatprep.subr.mxu0 0.0
    %2733 = vmatpush1.msra.mxu0 0.0
    %2734 = vmatprep.mubr.f32.mxu0 0.0
    %v2735 = vand.u32 %v2502, 4294901760
    %2736 = vmatmul.mubr.f32.gmra.mrb[0].mxu0 %v2735
    %v2737 = vpop.f32.mrb[0].mxu0
    %v2738 = vadd.f32 %v2596, %v2737
    %v2739 = vpop.f32.mrb[0].mxu0
    %v2740 = vadd.f32 %v2598, %v2739
    %2741 = vdwg.mxu0
    %v2742 = vand.u32 %v2487, 4294901760
    %v2743 = vsub.f32 %v2487, %v2742
    %2744 = vmatprep.subr.mxu0 %v2743
    %v2745 = vand.u32 %v2486, 4294901760
    %v2746 = vsub.f32 %v2486, %v2745
    %2747 = vmatpush1.msra.mxu0 %v2746
    %v2748 = vand.u32 %v2489, 4294901760
    %v2749 = vsub.f32 %v2489, %v2748
    %2750 = vmatprep.subr.mxu0 %v2749
    %v2751 = vand.u32 %v2488, 4294901760
    %v2752 = vsub.f32 %v2488, %v2751
    %2753 = vmatpush1.msra.mxu0 %v2752
    %v2754 = vand.u32 %v2491, 4294901760
    %v2755 = vsub.f32 %v2491, %v2754
    %2756 = vmatprep.subr.mxu0 %v2755
    %v2757 = vand.u32 %v2490, 4294901760
    %v2758 = vsub.f32 %v2490, %v2757
    %2759 = vmatpush1.msra.mxu0 %v2758
    %v2760 = vand.u32 %v2493, 4294901760
    %v2761 = vsub.f32 %v2493, %v2760
    %2762 = vmatprep.subr.mxu0 %v2761
    %v2763 = vand.u32 %v2492, 4294901760
    %v2764 = vsub.f32 %v2492, %v2763
    %2765 = vmatpush1.msra.mxu0 %v2764
    %v2766 = vand.u32 %v2495, 4294901760
    %v2767 = vsub.f32 %v2495, %v2766
    %2768 = vmatprep.subr.mxu0 %v2767
    %v2769 = vand.u32 %v2494, 4294901760
    %v2770 = vsub.f32 %v2494, %v2769
    %2771 = vmatpush1.msra.mxu0 %v2770
    %v2772 = vand.u32 %v2497, 4294901760
    %v2773 = vsub.f32 %v2497, %v2772
    %2774 = vmatprep.subr.mxu0 %v2773
    %v2775 = vand.u32 %v2496, 4294901760
    %v2776 = vsub.f32 %v2496, %v2775
    %2777 = vmatpush1.msra.mxu0 %v2776
    %v2778 = vand.u32 %v2508, 4294901760
    %v2779 = vsub.f32 %v2508, %v2778
    %2780 = vmatprep.subr.mxu0 %v2779
    %v2781 = vand.u32 %v2505, 4294901760
    %v2782 = vsub.f32 %v2505, %v2781
    %2783 = vmatpush1.msra.mxu0 %v2782
    %2784 = vmatprep.subr.mxu0 0.0
    %2785 = vmatpush1.msra.mxu0 0.0
    %2786 = vmatprep.subr.mxu0 0.0
    %2787 = vmatpush1.msra.mxu0 0.0
    %2788 = vmatprep.subr.mxu0 0.0
    %2789 = vmatpush1.msra.mxu0 0.0
    %2790 = vmatprep.subr.mxu0 0.0
    %2791 = vmatpush1.msra.mxu0 0.0
    %2792 = vmatprep.subr.mxu0 0.0
    %2793 = vmatpush1.msra.mxu0 0.0
    %2794 = vmatprep.subr.mxu0 0.0
    %2795 = vmatpush1.msra.mxu0 0.0
    %2796 = vmatprep.subr.mxu0 0.0
    %2797 = vmatpush1.msra.mxu0 0.0
    %2798 = vmatprep.subr.mxu0 0.0
    %2799 = vmatpush1.msra.mxu0 0.0
    %2800 = vmatprep.subr.mxu0 0.0
    %2801 = vmatpush1.msra.mxu0 0.0
    %2802 = vmatprep.subr.mxu0 0.0
    %2803 = vmatpush1.msra.mxu0 0.0
    %2804 = vmatprep.subr.mxu0 0.0
    %2805 = vmatpush1.msra.mxu0 0.0
    %2806 = vmatprep.subr.mxu0 0.0
    %2807 = vmatpush1.msra.mxu0 0.0
    %2808 = vmatprep.subr.mxu0 0.0
    %2809 = vmatpush1.msra.mxu0 0.0
    %2810 = vmatprep.subr.mxu0 0.0
    %2811 = vmatpush1.msra.mxu0 0.0
    %2812 = vmatprep.subr.mxu0 0.0
    %2813 = vmatpush1.msra.mxu0 0.0
    %2814 = vmatprep.subr.mxu0 0.0
    %2815 = vmatpush1.msra.mxu0 0.0
    %2816 = vmatprep.subr.mxu0 0.0
    %2817 = vmatpush1.msra.mxu0 0.0
    %2818 = vmatprep.subr.mxu0 0.0
    %2819 = vmatpush1.msra.mxu0 0.0
    %2820 = vmatprep.subr.mxu0 0.0
    %2821 = vmatpush1.msra.mxu0 0.0
    %2822 = vmatprep.subr.mxu0 0.0
    %2823 = vmatpush1.msra.mxu0 0.0
    %2824 = vmatprep.subr.mxu0 0.0
    %2825 = vmatpush1.msra.mxu0 0.0
    %2826 = vmatprep.subr.mxu0 0.0
    %2827 = vmatpush1.msra.mxu0 0.0
    %2828 = vmatprep.subr.mxu0 0.0
    %2829 = vmatpush1.msra.mxu0 0.0
    %2830 = vmatprep.subr.mxu0 0.0
    %2831 = vmatpush1.msra.mxu0 0.0
    %2832 = vmatprep.subr.mxu0 0.0
    %2833 = vmatpush1.msra.mxu0 0.0
    %2834 = vmatprep.mubr.f32.mxu0 0.0
    %v2835 = vand.u32 %v2502, 4294901760
    %v2836 = vsub.f32 %v2502, %v2835
    %2837 = vmatmul.mubr.f32.gmra.mrb[0].mxu0 %v2836
    %v2838 = vpop.f32.mrb[0].mxu0
    %v2839 = vadd.f32 %v2738, %v2838
    %v2840 = vpop.f32.mrb[0].mxu0
    %v2841 = vadd.f32 %v2740, %v2840
    %2842 = vdwg.mxu0
    %v2843 = vand.u32 %v2487, 4294901760
    %2844 = vmatprep.subr.mxu0 %v2843
    %v2845 = vand.u32 %v2486, 4294901760
    %2846 = vmatpush1.msra.mxu0 %v2845
    %v2847 = vand.u32 %v2489, 4294901760
    %2848 = vmatprep.subr.mxu0 %v2847
    %v2849 = vand.u32 %v2488, 4294901760
    %2850 = vmatpush1.msra.mxu0 %v2849
    %v2851 = vand.u32 %v2491, 4294901760
    %2852 = vmatprep.subr.mxu0 %v2851
    %v2853 = vand.u32 %v2490, 4294901760
    %2854 = vmatpush1.msra.mxu0 %v2853
    %v2855 = vand.u32 %v2493, 4294901760
    %2856 = vmatprep.subr.mxu0 %v2855
    %v2857 = vand.u32 %v2492, 4294901760
    %2858 = vmatpush1.msra.mxu0 %v2857
    %v2859 = vand.u32 %v2495, 4294901760
    %2860 = vmatprep.subr.mxu0 %v2859
    %v2861 = vand.u32 %v2494, 4294901760
    %2862 = vmatpush1.msra.mxu0 %v2861
    %v2863 = vand.u32 %v2497, 4294901760
    %2864 = vmatprep.subr.mxu0 %v2863
    %v2865 = vand.u32 %v2496, 4294901760
    %2866 = vmatpush1.msra.mxu0 %v2865
    %v2867 = vand.u32 %v2508, 4294901760
    %2868 = vmatprep.subr.mxu0 %v2867
    %v2869 = vand.u32 %v2505, 4294901760
    %2870 = vmatpush1.msra.mxu0 %v2869
    %2871 = vmatprep.subr.mxu0 0.0
    %2872 = vmatpush1.msra.mxu0 0.0
    %2873 = vmatprep.subr.mxu0 0.0
    %2874 = vmatpush1.msra.mxu0 0.0
    %2875 = vmatprep.subr.mxu0 0.0
    %2876 = vmatpush1.msra.mxu0 0.0
    %2877 = vmatprep.subr.mxu0 0.0
    %2878 = vmatpush1.msra.mxu0 0.0
    %2879 = vmatprep.subr.mxu0 0.0
    %2880 = vmatpush1.msra.mxu0 0.0
    %2881 = vmatprep.subr.mxu0 0.0
    %2882 = vmatpush1.msra.mxu0 0.0
    %2883 = vmatprep.subr.mxu0 0.0
    %2884 = vmatpush1.msra.mxu0 0.0
    %2885 = vmatprep.subr.mxu0 0.0
    %2886 = vmatpush1.msra.mxu0 0.0
    %2887 = vmatprep.subr.mxu0 0.0
    %2888 = vmatpush1.msra.mxu0 0.0
    %2889 = vmatprep.subr.mxu0 0.0
    %2890 = vmatpush1.msra.mxu0 0.0
    %2891 = vmatprep.subr.mxu0 0.0
    %2892 = vmatpush1.msra.mxu0 0.0
    %2893 = vmatprep.subr.mxu0 0.0
    %2894 = vmatpush1.msra.mxu0 0.0
    %2895 = vmatprep.subr.mxu0 0.0
    %2896 = vmatpush1.msra.mxu0 0.0
    %2897 = vmatprep.subr.mxu0 0.0
    %2898 = vmatpush1.msra.mxu0 0.0
    %2899 = vmatprep.subr.mxu0 0.0
    %2900 = vmatpush1.msra.mxu0 0.0
    %2901 = vmatprep.subr.mxu0 0.0
    %2902 = vmatpush1.msra.mxu0 0.0
    %2903 = vmatprep.subr.mxu0 0.0
    %2904 = vmatpush1.msra.mxu0 0.0
    %2905 = vmatprep.subr.mxu0 0.0
    %2906 = vmatpush1.msra.mxu0 0.0
    %2907 = vmatprep.subr.mxu0 0.0
    %2908 = vmatpush1.msra.mxu0 0.0
    %2909 = vmatprep.subr.mxu0 0.0
    %2910 = vmatpush1.msra.mxu0 0.0
    %2911 = vmatprep.subr.mxu0 0.0
    %2912 = vmatpush1.msra.mxu0 0.0
    %2913 = vmatprep.subr.mxu0 0.0
    %2914 = vmatpush1.msra.mxu0 0.0
    %2915 = vmatprep.subr.mxu0 0.0
    %2916 = vmatpush1.msra.mxu0 0.0
    %2917 = vmatprep.subr.mxu0 0.0
    %2918 = vmatpush1.msra.mxu0 0.0
    %2919 = vmatprep.subr.mxu0 0.0
    %2920 = vmatpush1.msra.mxu0 0.0
    %2921 = vmatprep.mubr.f32.mxu0 0.0
    %v2922 = vand.u32 %v2502, 4294901760
    %v2923 = vsub.f32 %v2502, %v2922
    %v2924 = vand.u32 %v2923, 4294901760
    %2925 = vmatmul.mubr.f32.gmra.mrb[0].mxu0 %v2924
    %v2926 = vpop.f32.mrb[0].mxu0
    %v2927 = vadd.f32 %v2839, %v2926
    %v2928 = vpop.f32.mrb[0].mxu0
    %v2929 = vadd.f32 %v2841, %v2928
    %2930 = vdwg.mxu0
    %v2931 = vand.u32 %v2487, 4294901760
    %v2932 = vsub.f32 %v2487, %v2931
    %v2933 = vand.u32 %v2932, 4294901760
    %2934 = vmatprep.subr.mxu0 %v2933
    %v2935 = vand.u32 %v2486, 4294901760
    %v2936 = vsub.f32 %v2486, %v2935
    %v2937 = vand.u32 %v2936, 4294901760
    %2938 = vmatpush1.msra.mxu0 %v2937
    %v2939 = vand.u32 %v2489, 4294901760
    %v2940 = vsub.f32 %v2489, %v2939
    %v2941 = vand.u32 %v2940, 4294901760
    %2942 = vmatprep.subr.mxu0 %v2941
    %v2943 = vand.u32 %v2488, 4294901760
    %v2944 = vsub.f32 %v2488, %v2943
    %v2945 = vand.u32 %v2944, 4294901760
    %2946 = vmatpush1.msra.mxu0 %v2945
    %v2947 = vand.u32 %v2491, 4294901760
    %v2948 = vsub.f32 %v2491, %v2947
    %v2949 = vand.u32 %v2948, 4294901760
    %2950 = vmatprep.subr.mxu0 %v2949
    %v2951 = vand.u32 %v2490, 4294901760
    %v2952 = vsub.f32 %v2490, %v2951
    %v2953 = vand.u32 %v2952, 4294901760
    %2954 = vmatpush1.msra.mxu0 %v2953
    %v2955 = vand.u32 %v2493, 4294901760
    %v2956 = vsub.f32 %v2493, %v2955
    %v2957 = vand.u32 %v2956, 4294901760
    %2958 = vmatprep.subr.mxu0 %v2957
    %v2959 = vand.u32 %v2492, 4294901760
    %v2960 = vsub.f32 %v2492, %v2959
    %v2961 = vand.u32 %v2960, 4294901760
    %2962 = vmatpush1.msra.mxu0 %v2961
    %v2963 = vand.u32 %v2495, 4294901760
    %v2964 = vsub.f32 %v2495, %v2963
    %v2965 = vand.u32 %v2964, 4294901760
    %2966 = vmatprep.subr.mxu0 %v2965
    %v2967 = vand.u32 %v2494, 4294901760
    %v2968 = vsub.f32 %v2494, %v2967
    %v2969 = vand.u32 %v2968, 4294901760
    %2970 = vmatpush1.msra.mxu0 %v2969
    %v2971 = vand.u32 %v2497, 4294901760
    %v2972 = vsub.f32 %v2497, %v2971
    %v2973 = vand.u32 %v2972, 4294901760
    %2974 = vmatprep.subr.mxu0 %v2973
    %v2975 = vand.u32 %v2496, 4294901760
    %v2976 = vsub.f32 %v2496, %v2975
    %v2977 = vand.u32 %v2976, 4294901760
    %2978 = vmatpush1.msra.mxu0 %v2977
    %v2979 = vand.u32 %v2508, 4294901760
    %v2980 = vsub.f32 %v2508, %v2979
    %v2981 = vand.u32 %v2980, 4294901760
    %2982 = vmatprep.subr.mxu0 %v2981
    %v2983 = vand.u32 %v2505, 4294901760
    %v2984 = vsub.f32 %v2505, %v2983
    %v2985 = vand.u32 %v2984, 4294901760
    %2986 = vmatpush1.msra.mxu0 %v2985
    %2987 = vmatprep.subr.mxu0 0.0
    %2988 = vmatpush1.msra.mxu0 0.0
    %2989 = vmatprep.subr.mxu0 0.0
    %2990 = vmatpush1.msra.mxu0 0.0
    %2991 = vmatprep.subr.mxu0 0.0
    %2992 = vmatpush1.msra.mxu0 0.0
    %2993 = vmatprep.subr.mxu0 0.0
    %2994 = vmatpush1.msra.mxu0 0.0
    %2995 = vmatprep.subr.mxu0 0.0
    %2996 = vmatpush1.msra.mxu0 0.0
    %2997 = vmatprep.subr.mxu0 0.0
    %2998 = vmatpush1.msra.mxu0 0.0
    %2999 = vmatprep.subr.mxu0 0.0
    %3000 = vmatpush1.msra.mxu0 0.0
    %3001 = vmatprep.subr.mxu0 0.0
    %3002 = vmatpush1.msra.mxu0 0.0
    %3003 = vmatprep.subr.mxu0 0.0
    %3004 = vmatpush1.msra.mxu0 0.0
    %3005 = vmatprep.subr.mxu0 0.0
    %3006 = vmatpush1.msra.mxu0 0.0
    %3007 = vmatprep.subr.mxu0 0.0
    %3008 = vmatpush1.msra.mxu0 0.0
    %3009 = vmatprep.subr.mxu0 0.0
    %3010 = vmatpush1.msra.mxu0 0.0
    %3011 = vmatprep.subr.mxu0 0.0
    %3012 = vmatpush1.msra.mxu0 0.0
    %3013 = vmatprep.subr.mxu0 0.0
    %3014 = vmatpush1.msra.mxu0 0.0
    %3015 = vmatprep.subr.mxu0 0.0
    %3016 = vmatpush1.msra.mxu0 0.0
    %3017 = vmatprep.subr.mxu0 0.0
    %3018 = vmatpush1.msra.mxu0 0.0
    %3019 = vmatprep.subr.mxu0 0.0
    %3020 = vmatpush1.msra.mxu0 0.0
    %3021 = vmatprep.subr.mxu0 0.0
    %3022 = vmatpush1.msra.mxu0 0.0
    %3023 = vmatprep.subr.mxu0 0.0
    %3024 = vmatpush1.msra.mxu0 0.0
    %3025 = vmatprep.subr.mxu0 0.0
    %3026 = vmatpush1.msra.mxu0 0.0
    %3027 = vmatprep.subr.mxu0 0.0
    %3028 = vmatpush1.msra.mxu0 0.0
    %3029 = vmatprep.subr.mxu0 0.0
    %3030 = vmatpush1.msra.mxu0 0.0
    %3031 = vmatprep.subr.mxu0 0.0
    %3032 = vmatpush1.msra.mxu0 0.0
    %3033 = vmatprep.subr.mxu0 0.0
    %3034 = vmatpush1.msra.mxu0 0.0
    %3035 = vmatprep.subr.mxu0 0.0
    %3036 = vmatpush1.msra.mxu0 0.0
    %3037 = vmatprep.mubr.f32.mxu0 0.0
    %v3038 = vand.u32 %v2502, 4294901760
    %3039 = vmatmul.mubr.f32.gmra.mrb[0].mxu0 %v3038
    %v3040 = vpop.f32.mrb[0].mxu0
    %v3041 = vadd.f32 %v2927, %v3040
    %v3042 = vpop.f32.mrb[0].mxu0
    %v3043 = vadd.f32 %v2929, %v3042
    %3044 = vdwg.mxu0
    %v3045 = vand.u32 %v2487, 4294901760
    %3046 = vmatprep.subr.mxu0 %v3045
    %v3047 = vand.u32 %v2486, 4294901760
    %3048 = vmatpush1.msra.mxu0 %v3047
    %v3049 = vand.u32 %v2489, 4294901760
    %3050 = vmatprep.subr.mxu0 %v3049
    %v3051 = vand.u32 %v2488, 4294901760
    %3052 = vmatpush1.msra.mxu0 %v3051
    %v3053 = vand.u32 %v2491, 4294901760
    %3054 = vmatprep.subr.mxu0 %v3053
    %v3055 = vand.u32 %v2490, 4294901760
    %3056 = vmatpush1.msra.mxu0 %v3055
    %v3057 = vand.u32 %v2493, 4294901760
    %3058 = vmatprep.subr.mxu0 %v3057
    %v3059 = vand.u32 %v2492, 4294901760
    %3060 = vmatpush1.msra.mxu0 %v3059
    %v3061 = vand.u32 %v2495, 4294901760
    %3062 = vmatprep.subr.mxu0 %v3061
    %v3063 = vand.u32 %v2494, 4294901760
    %3064 = vmatpush1.msra.mxu0 %v3063
    %v3065 = vand.u32 %v2497, 4294901760
    %3066 = vmatprep.subr.mxu0 %v3065
    %v3067 = vand.u32 %v2496, 4294901760
    %3068 = vmatpush1.msra.mxu0 %v3067
    %v3069 = vand.u32 %v2508, 4294901760
    %3070 = vmatprep.subr.mxu0 %v3069
    %v3071 = vand.u32 %v2505, 4294901760
    %3072 = vmatpush1.msra.mxu0 %v3071
    %3073 = vmatprep.subr.mxu0 0.0
    %3074 = vmatpush1.msra.mxu0 0.0
    %3075 = vmatprep.subr.mxu0 0.0
    %3076 = vmatpush1.msra.mxu0 0.0
    %3077 = vmatprep.subr.mxu0 0.0
    %3078 = vmatpush1.msra.mxu0 0.0
    %3079 = vmatprep.subr.mxu0 0.0
    %3080 = vmatpush1.msra.mxu0 0.0
    %3081 = vmatprep.subr.mxu0 0.0
    %3082 = vmatpush1.msra.mxu0 0.0
    %3083 = vmatprep.subr.mxu0 0.0
    %3084 = vmatpush1.msra.mxu0 0.0
    %3085 = vmatprep.subr.mxu0 0.0
    %3086 = vmatpush1.msra.mxu0 0.0
    %3087 = vmatprep.subr.mxu0 0.0
    %3088 = vmatpush1.msra.mxu0 0.0
    %3089 = vmatprep.subr.mxu0 0.0
    %3090 = vmatpush1.msra.mxu0 0.0
    %3091 = vmatprep.subr.mxu0 0.0
    %3092 = vmatpush1.msra.mxu0 0.0
    %3093 = vmatprep.subr.mxu0 0.0
    %3094 = vmatpush1.msra.mxu0 0.0
    %3095 = vmatprep.subr.mxu0 0.0
    %3096 = vmatpush1.msra.mxu0 0.0
    %3097 = vmatprep.subr.mxu0 0.0
    %3098 = vmatpush1.msra.mxu0 0.0
    %3099 = vmatprep.subr.mxu0 0.0
    %3100 = vmatpush1.msra.mxu0 0.0
    %3101 = vmatprep.subr.mxu0 0.0
    %3102 = vmatpush1.msra.mxu0 0.0
    %3103 = vmatprep.subr.mxu0 0.0
    %3104 = vmatpush1.msra.mxu0 0.0
    %3105 = vmatprep.subr.mxu0 0.0
    %3106 = vmatpush1.msra.mxu0 0.0
    %3107 = vmatprep.subr.mxu0 0.0
    %3108 = vmatpush1.msra.mxu0 0.0
    %3109 = vmatprep.subr.mxu0 0.0
    %3110 = vmatpush1.msra.mxu0 0.0
    %3111 = vmatprep.subr.mxu0 0.0
    %3112 = vmatpush1.msra.mxu0 0.0
    %3113 = vmatprep.subr.mxu0 0.0
    %3114 = vmatpush1.msra.mxu0 0.0
    %3115 = vmatprep.subr.mxu0 0.0
    %3116 = vmatpush1.msra.mxu0 0.0
    %3117 = vmatprep.subr.mxu0 0.0
    %3118 = vmatpush1.msra.mxu0 0.0
    %3119 = vmatprep.subr.mxu0 0.0
    %3120 = vmatpush1.msra.mxu0 0.0
    %3121 = vmatprep.subr.mxu0 0.0
    %3122 = vmatpush1.msra.mxu0 0.0
    %3123 = vmatprep.mubr.f32.mxu0 0.0
    %v3124 = vand.u32 %v2502, 4294901760
    %3125 = vmatmul.mubr.f32.gmra.mrb[0].mxu0 %v3124
    %v3126 = vpop.f32.mrb[0].mxu0
    %v3127 = vadd.f32 %v3041, %v3126
    %v3128 = vpop.f32.mrb[0].mxu0
    %v3129 = vadd.f32 %v3043, %v3128
    %3130 = vdwg.mxu0
    %v3133 = vcombine.low %v3127, %v3129
    %3135 = vst [vmem:[#allocation2] sm:$0xff] %v3133
    // Predicated region
    $region30: #{tpu_custom_call.1} parent=1 // pred_check
      _
    $region31: #{tpu_custom_call.1} parent=1 // pred_check_branch
      %3137 = sbr.rel (0) target = $region33
    $region32: #{tpu_custom_call.1} parent=1 // pred_region
      %s3139 = ssub.s32 128, 128
      %3140 = vsyncadd [#allocation3], %s3139
      %s3142 = sshll.u32 [#allocation2], 4
      %s3143 = int_to_ptr.vmem [resolvable:$true] %s3142
      %3145 = dma.vmem_to_hbm [thread:$0]  %s3143, 128, %s7, [#allocation3]
    $region33: #{tpu_custom_call.1} parent=1 // pred_fallthru
      _
    // Predicated region
    $region34: #{tpu_custom_call.1} parent=1 // pred_check
      _
    $region35: #{tpu_custom_call.1} parent=1 // pred_check_branch
      %3147 = sbr.rel (0) target = $region37
    $region36: #{tpu_custom_call.1} parent=1 // pred_region
      %3148 = dma.done [#allocation3], 128
    $region37: #{tpu_custom_call.1} parent=1 // pred_fallthru
      _
    %3149 = vsyncpa [#allocation3], 1

</llo_original>
